<compile_context>
chip_gen: v5e
topology: v5e:2x2
jax: 0.10.0
libtpu: 0.0.40
codegen_flags: <defaults>
</compile_context>

<pallas_src>
import jax
import jax.numpy as jnp
from jax.experimental import pallas as pl
from jax.experimental.pallas import tpu as pltpu


def _round_up(x, m):
    return ((x + m - 1) // m) * m


def _make_kernel(K, W1, W2, He1, We1, Pe1, Pe2, Nacc):
    """Builds the fused per-batch-element kernel with shape constants baked in."""

    def kernel(bn_ref, w_ref, b_ref, x1_ref, x2_ref, o_ref):
        x1 = x1_ref[0]          # (Cin, L1)  bf16, flat row-major exemplar + pad
        x2 = x2_ref[0]          # (Cin, L2)  bf16, flat row-major search + pad
        bias = b_ref[...]       # (Cout, 1)  f32
        cout = b_ref.shape[0]

        # ---- embedding net: KxK valid conv + bias + ReLU for both images ----
        # K*K accumulated MXU matmuls (bf16 operands, f32 accumulation) over
        # contiguous shifted lane slices of the flat images.
        e1 = jnp.zeros((cout, Pe1), jnp.float32)
        e2 = jnp.zeros((cout, Pe2), jnp.float32)
        for kh in range(K):
            for kw in range(K):
                wt = w_ref[kh * K + kw]                        # (Cout, Cin) bf16
                o1 = kh * W1 + kw
                o2 = kh * W2 + kw
                e1 = e1 + jnp.dot(wt, x1[:, o1:o1 + Pe1],
                                  preferred_element_type=jnp.float32)
                e2 = e2 + jnp.dot(wt, x2[:, o2:o2 + Pe2],
                                  preferred_element_type=jnp.float32)
        e1 = jnp.maximum(e1 + bias, 0.0)          # (Cout, Pe1), row stride W1
        e2 = jnp.maximum(e2 + bias, 0.0)          # (Cout, Pe2), row stride W2

        # ---- grouped cross-correlation + folded BatchNorm2d(1) --------------
        # corr[p] = sum_{c,dh,dw} e1[c, dh*W1+dw] * e2[c, p + dh*W2 + dw]
        # (p = oh*W2 + ow).  M=1 matmul can't use the MXU rows, so: He1*We1
        # shifted VPU FMAs on the VMEM-resident e2, then one sublane reduce.
        acc = jnp.zeros((cout, Nacc), jnp.float32)
        for dh in range(He1):
            for dw in range(We1):
                c1 = dh * W1 + dw
                c2 = dh * W2 + dw
                f = e1[:, c1:c1 + 1]                           # (Cout, 1)
                acc = acc + f * e2[:, c2:c2 + Nacc]            # lane-bcast FMA
        corr = jnp.sum(acc, axis=0, keepdims=True)             # (1, Nacc)

        # Eval-mode BatchNorm2d(1) folded to one FMA; lane-dense 128k store.
        o_ref[0] = corr * bn_ref[0] + bn_ref[1]

    return kernel


def siamese_forward(x1_nchw, x2_nchw, conv_w, conv_b, bn_params):
    """SiameseNet.forward (upscale=False) as one fused Pallas TPU kernel."""
    B, Cin, H1, W1 = x1_nchw.shape
    _, _, H2, W2 = x2_nchw.shape
    KK, _, Cout = conv_w.shape
    K = int(round(KK ** 0.5))

    He1, We1 = H1 - K + 1, W1 - K + 1         # exemplar embedding spatial dims
    He2, We2 = H2 - K + 1, W2 - K + 1         # search embedding spatial dims
    Ho, Wo = He2 - He1 + 1, We2 - We1 + 1     # correlation map spatial dims

    # Flat-layout extents (accumulator / buffer lane widths, 128-aligned where
    # it matters).  All garbage columns are provably never consumed.
    Pe1 = He1 * W1                                            # e1 width
    Nacc = _round_up(Ho * W2, 128)                            # corr/out width
    Pe2 = _round_up((He1 - 1) * W2 + (We1 - 1) + Nacc, 128)   # e2 width
    L1 = _round_up((K - 1) * (W1 + 1) + Pe1, 128)             # flat exemplar
    L2 = _round_up((K - 1) * (W2 + 1) + Pe2, 128)             # flat search

    # Wrapper-side layout plumbing: flatten + zero-pad + dtype cast only.
    x1f = jnp.pad(x1_nchw.reshape(B, Cin, H1 * W1),
                  ((0, 0), (0, 0), (0, L1 - H1 * W1))).astype(jnp.bfloat16)
    x2f = jnp.pad(x2_nchw.reshape(B, Cin, H2 * W2),
                  ((0, 0), (0, 0), (0, L2 - H2 * W2))).astype(jnp.bfloat16)
    wt = jnp.transpose(conv_w, (0, 2, 1)).astype(jnp.bfloat16)  # (KK, Cout, Cin)
    bcol = conv_b.reshape(Cout, 1).astype(jnp.float32)

    # Fold eval-mode BatchNorm2d(1) into a single (scale, shift) pair (SMEM).
    gamma, beta, mean, var = bn_params[0], bn_params[1], bn_params[2], bn_params[3]
    scale = gamma * jax.lax.rsqrt(var + 1e-5)
    shift = beta - mean * scale
    bn_ss = jnp.stack([scale, shift]).astype(jnp.float32)

    kernel = _make_kernel(K, W1, W2, He1, We1, Pe1, Pe2, Nacc)

    flops = 2 * B * (KK * Cout * Cin * (Pe1 + Pe2) + He1 * We1 * Cout * Nacc)
    bytes_accessed = (x1f.size + x2f.size + wt.size) * 2 \
        + (bcol.size + bn_ss.size) * 4 + B * Nacc * 4
    cost = pl.CostEstimate(flops=int(flops), transcendentals=0,
                           bytes_accessed=int(bytes_accessed))

    out = pl.pallas_call(
        kernel,
        out_shape=jax.ShapeDtypeStruct((B, 1, Nacc), jnp.float32),
        grid=(B,),
        in_specs=[
            pl.BlockSpec(memory_space=pltpu.MemorySpace.SMEM),      # bn (2,)
            pl.BlockSpec((KK, Cout, Cin), lambda n: (0, 0, 0)),     # weights
            pl.BlockSpec((Cout, 1), lambda n: (0, 0)),              # bias
            pl.BlockSpec((1, Cin, L1), lambda n: (n, 0, 0)),        # exemplar
            pl.BlockSpec((1, Cin, L2), lambda n: (n, 0, 0)),        # search
        ],
        out_specs=pl.BlockSpec((1, 1, Nacc), lambda n: (n, 0, 0)),
        compiler_params=pltpu.CompilerParams(dimension_semantics=("parallel",)),
        cost_estimate=cost,
    )(bn_ss, wt, bcol, x1f, x2f)

    # Valid correlation value for output (oh, ow) lives at flat index
    # oh*W2 + ow.  PyTorch: F.conv2d(...).permute(1,0,2,3) -> (B, 1, Ho, Wo).
    return out[:, :, :Ho * W2].reshape(B, 1, Ho, W2)[:, :, :, :Wo]


# ----------------------------------------------------------------------------
# Pure-JAX reference (NCHW) for a correctness check.
# ----------------------------------------------------------------------------
def _reference(x1_nchw, x2_nchw, conv_w, conv_b, bn_params):
    K = int(round(conv_w.shape[0] ** 0.5))
    Cin, Cout = conv_w.shape[1], conv_w.shape[2]
    w_oihw = jnp.transpose(conv_w.reshape(K, K, Cin, Cout), (3, 2, 0, 1))

    def emb(x):
        y = jax.lax.conv_general_dilated(
            x, w_oihw, (1, 1), "VALID",
            dimension_numbers=("NCHW", "OIHW", "NCHW"),
            precision=jax.lax.Precision.HIGHEST)
        return jnp.maximum(y + conv_b.reshape(1, Cout, 1, 1), 0.0)

    e1 = emb(x1_nchw)
    e2 = emb(x2_nchw)
    B = e1.shape[0]
    maps = []
    for g in range(B):
        maps.append(jax.lax.conv_general_dilated(
            e2[g:g + 1], e1[g:g + 1], (1, 1), "VALID",
            dimension_numbers=("NCHW", "OIHW", "NCHW"),
            precision=jax.lax.Precision.HIGHEST))
    mm = jnp.concatenate(maps, axis=0)          # (B, 1, Ho, Wo)
    gamma, beta, mean, var = bn_params
    return (mm - mean) * (gamma * jax.lax.rsqrt(var + 1e-5)) + beta


if __name__ == "__main__":
    key = jax.random.PRNGKey(0)
    k1, k2, k3, k4 = jax.random.split(key, 4)

    B, Cin, Cout, K = 2, 3, 8, 3
    H1 = W1 = 8      # exemplar image
    H2 = W2 = 16     # search image

    # PyTorch-convention NCHW inputs.
    x1 = jax.random.normal(k1, (B, Cin, H1, W1), jnp.float32)
    x2 = jax.random.normal(k2, (B, Cin, H2, W2), jnp.float32)

    # Synthetic embedding-net parameters: weight (KH*KW, Cin, Cout), tap index
    # kh*K + kw (HWIO-flat); bias (Cout,).
    conv_w = 0.1 * jax.random.normal(k3, (K * K, Cin, Cout), jnp.float32)
    conv_b = 0.01 * jax.random.normal(k4, (Cout,), jnp.float32)
    # BatchNorm2d(1) eval-mode params: [gamma, beta, running_mean, running_var]
    bn_params = jnp.array([1.3, 0.2, 0.1, 0.9], jnp.float32)

    fwd = jax.jit(siamese_forward)
    out = jax.block_until_ready(fwd(x1, x2, conv_w, conv_b, bn_params))

    # Embeddings 6x6 / 14x14 -> correlation map 9x9, channel dim 1.
    assert out.shape == (B, 1, 9, 9), out.shape

    ref = _reference(x1, x2, conv_w, conv_b, bn_params)
    err = float(jnp.max(jnp.abs(out - ref)))
    # bf16 matmul operands (f32 accumulation) -> loosened tolerance.
    assert jnp.allclose(out, ref, rtol=5e-2, atol=5e-2), err

    print("KERNEL_OK")
</pallas_src>

<mosaic_0001>
module attributes {stable_mosaic.version = 11 : i64} {
  func.func @kernel(%arg0: i32, %arg1: memref<2xf32, #tpu.memory_space<smem>>, %arg2: memref<9x8x3xbf16, #tpu.memory_space<vmem>>, %arg3: memref<8x1xf32, #tpu.memory_space<vmem>>, %arg4: memref<1x3x128xbf16, #tpu.memory_space<vmem>>, %arg5: memref<1x3x512xbf16, #tpu.memory_space<vmem>>, %arg6: memref<1x1x256xf32, #tpu.memory_space<vmem>>) attributes {dimension_semantics = [#tpu.dimension_semantics<parallel>], iteration_bounds = array<i64: 2>, scalar_prefetch = 0 : i64, scratch_operands = 0 : i64, tpu.core_type = #tpu.core_type<tc>, window_params = [{transform_indices = @transform_0, window_bounds = array<i64: 2>}, {pipeline_mode = #tpu.pipeline_mode<synchronous>, transform_indices = @transform_1, window_bounds = array<i64: 9, 8, 3>}, {pipeline_mode = #tpu.pipeline_mode<synchronous>, transform_indices = @transform_2, window_bounds = array<i64: 8, 1>}, {transform_indices = @transform_3, window_bounds = array<i64: 1, 3, 128>}, {transform_indices = @transform_4, window_bounds = array<i64: 1, 3, 512>}, {transform_indices = @transform_5, window_bounds = array<i64: 1, 1, 256>}]} {
    %c0 = arith.constant 0 : index
    %c0_0 = arith.constant 0 : index
    %c0_1 = arith.constant 0 : index
    %0 = vector.load %arg4[%c0, %c0_0, %c0_1] : memref<1x3x128xbf16, #tpu.memory_space<vmem>>, vector<1x3x128xbf16>
    %1 = vector.shape_cast %0 : vector<1x3x128xbf16> to vector<3x128xbf16>
    %c0_2 = arith.constant 0 : index
    %c0_3 = arith.constant 0 : index
    %c0_4 = arith.constant 0 : index
    %2 = vector.load %arg5[%c0_2, %c0_3, %c0_4] : memref<1x3x512xbf16, #tpu.memory_space<vmem>>, vector<1x3x512xbf16>
    %3 = vector.shape_cast %2 : vector<1x3x512xbf16> to vector<3x512xbf16>
    %c0_5 = arith.constant 0 : index
    %c0_6 = arith.constant 0 : index
    %4 = vector.load %arg3[%c0_5, %c0_6] : memref<8x1xf32, #tpu.memory_space<vmem>>, vector<8x1xf32>
    %cst = arith.constant 0.000000e+00 : f32
    %5 = vector.broadcast %cst : f32 to vector<8x48xf32>
    %cst_7 = arith.constant 0.000000e+00 : f32
    %6 = vector.broadcast %cst_7 : f32 to vector<8x384xf32>
    %c0_8 = arith.constant 0 : index
    %c0_9 = arith.constant 0 : index
    %c0_10 = arith.constant 0 : index
    %7 = vector.load %arg2[%c0_8, %c0_9, %c0_10] : memref<9x8x3xbf16, #tpu.memory_space<vmem>>, vector<1x8x3xbf16>
    %8 = vector.shape_cast %7 : vector<1x8x3xbf16> to vector<8x3xbf16>
    %9 = vector.extract_strided_slice %1 {offsets = [0, 0], sizes = [3, 48], strides = [1, 1]} : vector<3x128xbf16> to vector<3x48xbf16>
    %cst_11 = arith.constant dense<0.000000e+00> : vector<8x48xf32>
    %10 = tpu.matmul %8, %9, %cst_11 {dimension_numbers = #tpu.dot_dimension_numbers<[1], [0], [0], [1], [0, 0, 1, 1], [], []>} : vector<8x3xbf16>, vector<3x48xbf16>, vector<8x48xf32> -> vector<8x48xf32>
    %11 = arith.addf %5, %10 : vector<8x48xf32>
    %12 = vector.extract_strided_slice %3 {offsets = [0, 0], sizes = [3, 384], strides = [1, 1]} : vector<3x512xbf16> to vector<3x384xbf16>
    %cst_12 = arith.constant dense<0.000000e+00> : vector<8x384xf32>
    %13 = tpu.matmul %8, %12, %cst_12 {dimension_numbers = #tpu.dot_dimension_numbers<[1], [0], [0], [1], [0, 0, 1, 1], [], []>} : vector<8x3xbf16>, vector<3x384xbf16>, vector<8x384xf32> -> vector<8x384xf32>
    %14 = arith.addf %6, %13 : vector<8x384xf32>
    %c1 = arith.constant 1 : index
    %c0_13 = arith.constant 0 : index
    %c0_14 = arith.constant 0 : index
    %15 = vector.load %arg2[%c1, %c0_13, %c0_14] : memref<9x8x3xbf16, #tpu.memory_space<vmem>>, vector<1x8x3xbf16>
    %16 = vector.shape_cast %15 : vector<1x8x3xbf16> to vector<8x3xbf16>
    %17 = vector.extract_strided_slice %1 {offsets = [0, 1], sizes = [3, 48], strides = [1, 1]} : vector<3x128xbf16> to vector<3x48xbf16>
    %cst_15 = arith.constant dense<0.000000e+00> : vector<8x48xf32>
    %18 = tpu.matmul %16, %17, %cst_15 {dimension_numbers = #tpu.dot_dimension_numbers<[1], [0], [0], [1], [0, 0, 1, 1], [], []>} : vector<8x3xbf16>, vector<3x48xbf16>, vector<8x48xf32> -> vector<8x48xf32>
    %19 = arith.addf %11, %18 : vector<8x48xf32>
    %20 = vector.extract_strided_slice %3 {offsets = [0, 1], sizes = [3, 384], strides = [1, 1]} : vector<3x512xbf16> to vector<3x384xbf16>
    %cst_16 = arith.constant dense<0.000000e+00> : vector<8x384xf32>
    %21 = tpu.matmul %16, %20, %cst_16 {dimension_numbers = #tpu.dot_dimension_numbers<[1], [0], [0], [1], [0, 0, 1, 1], [], []>} : vector<8x3xbf16>, vector<3x384xbf16>, vector<8x384xf32> -> vector<8x384xf32>
    %22 = arith.addf %14, %21 : vector<8x384xf32>
    %c2 = arith.constant 2 : index
    %c0_17 = arith.constant 0 : index
    %c0_18 = arith.constant 0 : index
    %23 = vector.load %arg2[%c2, %c0_17, %c0_18] : memref<9x8x3xbf16, #tpu.memory_space<vmem>>, vector<1x8x3xbf16>
    %24 = vector.shape_cast %23 : vector<1x8x3xbf16> to vector<8x3xbf16>
    %25 = vector.extract_strided_slice %1 {offsets = [0, 2], sizes = [3, 48], strides = [1, 1]} : vector<3x128xbf16> to vector<3x48xbf16>
    %cst_19 = arith.constant dense<0.000000e+00> : vector<8x48xf32>
    %26 = tpu.matmul %24, %25, %cst_19 {dimension_numbers = #tpu.dot_dimension_numbers<[1], [0], [0], [1], [0, 0, 1, 1], [], []>} : vector<8x3xbf16>, vector<3x48xbf16>, vector<8x48xf32> -> vector<8x48xf32>
    %27 = arith.addf %19, %26 : vector<8x48xf32>
    %28 = vector.extract_strided_slice %3 {offsets = [0, 2], sizes = [3, 384], strides = [1, 1]} : vector<3x512xbf16> to vector<3x384xbf16>
    %cst_20 = arith.constant dense<0.000000e+00> : vector<8x384xf32>
    %29 = tpu.matmul %24, %28, %cst_20 {dimension_numbers = #tpu.dot_dimension_numbers<[1], [0], [0], [1], [0, 0, 1, 1], [], []>} : vector<8x3xbf16>, vector<3x384xbf16>, vector<8x384xf32> -> vector<8x384xf32>
    %30 = arith.addf %22, %29 : vector<8x384xf32>
    %c3 = arith.constant 3 : index
    %c0_21 = arith.constant 0 : index
    %c0_22 = arith.constant 0 : index
    %31 = vector.load %arg2[%c3, %c0_21, %c0_22] : memref<9x8x3xbf16, #tpu.memory_space<vmem>>, vector<1x8x3xbf16>
    %32 = vector.shape_cast %31 : vector<1x8x3xbf16> to vector<8x3xbf16>
    %33 = vector.extract_strided_slice %1 {offsets = [0, 8], sizes = [3, 48], strides = [1, 1]} : vector<3x128xbf16> to vector<3x48xbf16>
    %cst_23 = arith.constant dense<0.000000e+00> : vector<8x48xf32>
    %34 = tpu.matmul %32, %33, %cst_23 {dimension_numbers = #tpu.dot_dimension_numbers<[1], [0], [0], [1], [0, 0, 1, 1], [], []>} : vector<8x3xbf16>, vector<3x48xbf16>, vector<8x48xf32> -> vector<8x48xf32>
    %35 = arith.addf %27, %34 : vector<8x48xf32>
    %36 = vector.extract_strided_slice %3 {offsets = [0, 16], sizes = [3, 384], strides = [1, 1]} : vector<3x512xbf16> to vector<3x384xbf16>
    %cst_24 = arith.constant dense<0.000000e+00> : vector<8x384xf32>
    %37 = tpu.matmul %32, %36, %cst_24 {dimension_numbers = #tpu.dot_dimension_numbers<[1], [0], [0], [1], [0, 0, 1, 1], [], []>} : vector<8x3xbf16>, vector<3x384xbf16>, vector<8x384xf32> -> vector<8x384xf32>
    %38 = arith.addf %30, %37 : vector<8x384xf32>
    %c4 = arith.constant 4 : index
    %c0_25 = arith.constant 0 : index
    %c0_26 = arith.constant 0 : index
    %39 = vector.load %arg2[%c4, %c0_25, %c0_26] : memref<9x8x3xbf16, #tpu.memory_space<vmem>>, vector<1x8x3xbf16>
    %40 = vector.shape_cast %39 : vector<1x8x3xbf16> to vector<8x3xbf16>
    %41 = vector.extract_strided_slice %1 {offsets = [0, 9], sizes = [3, 48], strides = [1, 1]} : vector<3x128xbf16> to vector<3x48xbf16>
    %cst_27 = arith.constant dense<0.000000e+00> : vector<8x48xf32>
    %42 = tpu.matmul %40, %41, %cst_27 {dimension_numbers = #tpu.dot_dimension_numbers<[1], [0], [0], [1], [0, 0, 1, 1], [], []>} : vector<8x3xbf16>, vector<3x48xbf16>, vector<8x48xf32> -> vector<8x48xf32>
    %43 = arith.addf %35, %42 : vector<8x48xf32>
    %44 = vector.extract_strided_slice %3 {offsets = [0, 17], sizes = [3, 384], strides = [1, 1]} : vector<3x512xbf16> to vector<3x384xbf16>
    %cst_28 = arith.constant dense<0.000000e+00> : vector<8x384xf32>
    %45 = tpu.matmul %40, %44, %cst_28 {dimension_numbers = #tpu.dot_dimension_numbers<[1], [0], [0], [1], [0, 0, 1, 1], [], []>} : vector<8x3xbf16>, vector<3x384xbf16>, vector<8x384xf32> -> vector<8x384xf32>
    %46 = arith.addf %38, %45 : vector<8x384xf32>
    %c5 = arith.constant 5 : index
    %c0_29 = arith.constant 0 : index
    %c0_30 = arith.constant 0 : index
    %47 = vector.load %arg2[%c5, %c0_29, %c0_30] : memref<9x8x3xbf16, #tpu.memory_space<vmem>>, vector<1x8x3xbf16>
    %48 = vector.shape_cast %47 : vector<1x8x3xbf16> to vector<8x3xbf16>
    %49 = vector.extract_strided_slice %1 {offsets = [0, 10], sizes = [3, 48], strides = [1, 1]} : vector<3x128xbf16> to vector<3x48xbf16>
    %cst_31 = arith.constant dense<0.000000e+00> : vector<8x48xf32>
    %50 = tpu.matmul %48, %49, %cst_31 {dimension_numbers = #tpu.dot_dimension_numbers<[1], [0], [0], [1], [0, 0, 1, 1], [], []>} : vector<8x3xbf16>, vector<3x48xbf16>, vector<8x48xf32> -> vector<8x48xf32>
    %51 = arith.addf %43, %50 : vector<8x48xf32>
    %52 = vector.extract_strided_slice %3 {offsets = [0, 18], sizes = [3, 384], strides = [1, 1]} : vector<3x512xbf16> to vector<3x384xbf16>
    %cst_32 = arith.constant dense<0.000000e+00> : vector<8x384xf32>
    %53 = tpu.matmul %48, %52, %cst_32 {dimension_numbers = #tpu.dot_dimension_numbers<[1], [0], [0], [1], [0, 0, 1, 1], [], []>} : vector<8x3xbf16>, vector<3x384xbf16>, vector<8x384xf32> -> vector<8x384xf32>
    %54 = arith.addf %46, %53 : vector<8x384xf32>
    %c6 = arith.constant 6 : index
    %c0_33 = arith.constant 0 : index
    %c0_34 = arith.constant 0 : index
    %55 = vector.load %arg2[%c6, %c0_33, %c0_34] : memref<9x8x3xbf16, #tpu.memory_space<vmem>>, vector<1x8x3xbf16>
    %56 = vector.shape_cast %55 : vector<1x8x3xbf16> to vector<8x3xbf16>
    %57 = vector.extract_strided_slice %1 {offsets = [0, 16], sizes = [3, 48], strides = [1, 1]} : vector<3x128xbf16> to vector<3x48xbf16>
    %cst_35 = arith.constant dense<0.000000e+00> : vector<8x48xf32>
    %58 = tpu.matmul %56, %57, %cst_35 {dimension_numbers = #tpu.dot_dimension_numbers<[1], [0], [0], [1], [0, 0, 1, 1], [], []>} : vector<8x3xbf16>, vector<3x48xbf16>, vector<8x48xf32> -> vector<8x48xf32>
    %59 = arith.addf %51, %58 : vector<8x48xf32>
    %60 = vector.extract_strided_slice %3 {offsets = [0, 32], sizes = [3, 384], strides = [1, 1]} : vector<3x512xbf16> to vector<3x384xbf16>
    %cst_36 = arith.constant dense<0.000000e+00> : vector<8x384xf32>
    %61 = tpu.matmul %56, %60, %cst_36 {dimension_numbers = #tpu.dot_dimension_numbers<[1], [0], [0], [1], [0, 0, 1, 1], [], []>} : vector<8x3xbf16>, vector<3x384xbf16>, vector<8x384xf32> -> vector<8x384xf32>
    %62 = arith.addf %54, %61 : vector<8x384xf32>
    %c7 = arith.constant 7 : index
    %c0_37 = arith.constant 0 : index
    %c0_38 = arith.constant 0 : index
    %63 = vector.load %arg2[%c7, %c0_37, %c0_38] : memref<9x8x3xbf16, #tpu.memory_space<vmem>>, vector<1x8x3xbf16>
    %64 = vector.shape_cast %63 : vector<1x8x3xbf16> to vector<8x3xbf16>
    %65 = vector.extract_strided_slice %1 {offsets = [0, 17], sizes = [3, 48], strides = [1, 1]} : vector<3x128xbf16> to vector<3x48xbf16>
    %cst_39 = arith.constant dense<0.000000e+00> : vector<8x48xf32>
    %66 = tpu.matmul %64, %65, %cst_39 {dimension_numbers = #tpu.dot_dimension_numbers<[1], [0], [0], [1], [0, 0, 1, 1], [], []>} : vector<8x3xbf16>, vector<3x48xbf16>, vector<8x48xf32> -> vector<8x48xf32>
    %67 = arith.addf %59, %66 : vector<8x48xf32>
    %68 = vector.extract_strided_slice %3 {offsets = [0, 33], sizes = [3, 384], strides = [1, 1]} : vector<3x512xbf16> to vector<3x384xbf16>
    %cst_40 = arith.constant dense<0.000000e+00> : vector<8x384xf32>
    %69 = tpu.matmul %64, %68, %cst_40 {dimension_numbers = #tpu.dot_dimension_numbers<[1], [0], [0], [1], [0, 0, 1, 1], [], []>} : vector<8x3xbf16>, vector<3x384xbf16>, vector<8x384xf32> -> vector<8x384xf32>
    %70 = arith.addf %62, %69 : vector<8x384xf32>
    %c8 = arith.constant 8 : index
    %c0_41 = arith.constant 0 : index
    %c0_42 = arith.constant 0 : index
    %71 = vector.load %arg2[%c8, %c0_41, %c0_42] : memref<9x8x3xbf16, #tpu.memory_space<vmem>>, vector<1x8x3xbf16>
    %72 = vector.shape_cast %71 : vector<1x8x3xbf16> to vector<8x3xbf16>
    %73 = vector.extract_strided_slice %1 {offsets = [0, 18], sizes = [3, 48], strides = [1, 1]} : vector<3x128xbf16> to vector<3x48xbf16>
    %cst_43 = arith.constant dense<0.000000e+00> : vector<8x48xf32>
    %74 = tpu.matmul %72, %73, %cst_43 {dimension_numbers = #tpu.dot_dimension_numbers<[1], [0], [0], [1], [0, 0, 1, 1], [], []>} : vector<8x3xbf16>, vector<3x48xbf16>, vector<8x48xf32> -> vector<8x48xf32>
    %75 = arith.addf %67, %74 : vector<8x48xf32>
    %76 = vector.extract_strided_slice %3 {offsets = [0, 34], sizes = [3, 384], strides = [1, 1]} : vector<3x512xbf16> to vector<3x384xbf16>
    %cst_44 = arith.constant dense<0.000000e+00> : vector<8x384xf32>
    %77 = tpu.matmul %72, %76, %cst_44 {dimension_numbers = #tpu.dot_dimension_numbers<[1], [0], [0], [1], [0, 0, 1, 1], [], []>} : vector<8x3xbf16>, vector<3x384xbf16>, vector<8x384xf32> -> vector<8x384xf32>
    %78 = arith.addf %70, %77 : vector<8x384xf32>
    %79 = vector.broadcast %4 : vector<8x1xf32> to vector<8x48xf32>
    %80 = arith.addf %75, %79 : vector<8x48xf32>
    %cst_45 = arith.constant 0.000000e+00 : f32
    %81 = vector.broadcast %cst_45 : f32 to vector<8x48xf32>
    %82 = arith.maximumf %80, %81 : vector<8x48xf32>
    %83 = vector.broadcast %4 : vector<8x1xf32> to vector<8x384xf32>
    %84 = arith.addf %78, %83 : vector<8x384xf32>
    %cst_46 = arith.constant 0.000000e+00 : f32
    %85 = vector.broadcast %cst_46 : f32 to vector<8x384xf32>
    %86 = arith.maximumf %84, %85 : vector<8x384xf32>
    %cst_47 = arith.constant 0.000000e+00 : f32
    %87 = vector.broadcast %cst_47 : f32 to vector<8x256xf32>
    %88 = vector.extract_strided_slice %82 {offsets = [0, 0], sizes = [8, 1], strides = [1, 1]} : vector<8x48xf32> to vector<8x1xf32>
    %89 = vector.extract_strided_slice %86 {offsets = [0, 0], sizes = [8, 256], strides = [1, 1]} : vector<8x384xf32> to vector<8x256xf32>
    %90 = vector.broadcast %88 : vector<8x1xf32> to vector<8x256xf32>
    %91 = arith.mulf %90, %89 : vector<8x256xf32>
    %92 = arith.addf %87, %91 : vector<8x256xf32>
    %93 = vector.extract_strided_slice %82 {offsets = [0, 1], sizes = [8, 1], strides = [1, 1]} : vector<8x48xf32> to vector<8x1xf32>
    %94 = vector.extract_strided_slice %86 {offsets = [0, 1], sizes = [8, 256], strides = [1, 1]} : vector<8x384xf32> to vector<8x256xf32>
    %95 = vector.broadcast %93 : vector<8x1xf32> to vector<8x256xf32>
    %96 = arith.mulf %95, %94 : vector<8x256xf32>
    %97 = arith.addf %92, %96 : vector<8x256xf32>
    %98 = vector.extract_strided_slice %82 {offsets = [0, 2], sizes = [8, 1], strides = [1, 1]} : vector<8x48xf32> to vector<8x1xf32>
    %99 = vector.extract_strided_slice %86 {offsets = [0, 2], sizes = [8, 256], strides = [1, 1]} : vector<8x384xf32> to vector<8x256xf32>
    %100 = vector.broadcast %98 : vector<8x1xf32> to vector<8x256xf32>
    %101 = arith.mulf %100, %99 : vector<8x256xf32>
    %102 = arith.addf %97, %101 : vector<8x256xf32>
    %103 = vector.extract_strided_slice %82 {offsets = [0, 3], sizes = [8, 1], strides = [1, 1]} : vector<8x48xf32> to vector<8x1xf32>
    %104 = vector.extract_strided_slice %86 {offsets = [0, 3], sizes = [8, 256], strides = [1, 1]} : vector<8x384xf32> to vector<8x256xf32>
    %105 = vector.broadcast %103 : vector<8x1xf32> to vector<8x256xf32>
    %106 = arith.mulf %105, %104 : vector<8x256xf32>
    %107 = arith.addf %102, %106 : vector<8x256xf32>
    %108 = vector.extract_strided_slice %82 {offsets = [0, 4], sizes = [8, 1], strides = [1, 1]} : vector<8x48xf32> to vector<8x1xf32>
    %109 = vector.extract_strided_slice %86 {offsets = [0, 4], sizes = [8, 256], strides = [1, 1]} : vector<8x384xf32> to vector<8x256xf32>
    %110 = vector.broadcast %108 : vector<8x1xf32> to vector<8x256xf32>
    %111 = arith.mulf %110, %109 : vector<8x256xf32>
    %112 = arith.addf %107, %111 : vector<8x256xf32>
    %113 = vector.extract_strided_slice %82 {offsets = [0, 5], sizes = [8, 1], strides = [1, 1]} : vector<8x48xf32> to vector<8x1xf32>
    %114 = vector.extract_strided_slice %86 {offsets = [0, 5], sizes = [8, 256], strides = [1, 1]} : vector<8x384xf32> to vector<8x256xf32>
    %115 = vector.broadcast %113 : vector<8x1xf32> to vector<8x256xf32>
    %116 = arith.mulf %115, %114 : vector<8x256xf32>
    %117 = arith.addf %112, %116 : vector<8x256xf32>
    %118 = vector.extract_strided_slice %82 {offsets = [0, 8], sizes = [8, 1], strides = [1, 1]} : vector<8x48xf32> to vector<8x1xf32>
    %119 = vector.extract_strided_slice %86 {offsets = [0, 16], sizes = [8, 256], strides = [1, 1]} : vector<8x384xf32> to vector<8x256xf32>
    %120 = vector.broadcast %118 : vector<8x1xf32> to vector<8x256xf32>
    %121 = arith.mulf %120, %119 : vector<8x256xf32>
    %122 = arith.addf %117, %121 : vector<8x256xf32>
    %123 = vector.extract_strided_slice %82 {offsets = [0, 9], sizes = [8, 1], strides = [1, 1]} : vector<8x48xf32> to vector<8x1xf32>
    %124 = vector.extract_strided_slice %86 {offsets = [0, 17], sizes = [8, 256], strides = [1, 1]} : vector<8x384xf32> to vector<8x256xf32>
    %125 = vector.broadcast %123 : vector<8x1xf32> to vector<8x256xf32>
    %126 = arith.mulf %125, %124 : vector<8x256xf32>
    %127 = arith.addf %122, %126 : vector<8x256xf32>
    %128 = vector.extract_strided_slice %82 {offsets = [0, 10], sizes = [8, 1], strides = [1, 1]} : vector<8x48xf32> to vector<8x1xf32>
    %129 = vector.extract_strided_slice %86 {offsets = [0, 18], sizes = [8, 256], strides = [1, 1]} : vector<8x384xf32> to vector<8x256xf32>
    %130 = vector.broadcast %128 : vector<8x1xf32> to vector<8x256xf32>
    %131 = arith.mulf %130, %129 : vector<8x256xf32>
    %132 = arith.addf %127, %131 : vector<8x256xf32>
    %133 = vector.extract_strided_slice %82 {offsets = [0, 11], sizes = [8, 1], strides = [1, 1]} : vector<8x48xf32> to vector<8x1xf32>
    %134 = vector.extract_strided_slice %86 {offsets = [0, 19], sizes = [8, 256], strides = [1, 1]} : vector<8x384xf32> to vector<8x256xf32>
    %135 = vector.broadcast %133 : vector<8x1xf32> to vector<8x256xf32>
    %136 = arith.mulf %135, %134 : vector<8x256xf32>
    %137 = arith.addf %132, %136 : vector<8x256xf32>
    %138 = vector.extract_strided_slice %82 {offsets = [0, 12], sizes = [8, 1], strides = [1, 1]} : vector<8x48xf32> to vector<8x1xf32>
    %139 = vector.extract_strided_slice %86 {offsets = [0, 20], sizes = [8, 256], strides = [1, 1]} : vector<8x384xf32> to vector<8x256xf32>
    %140 = vector.broadcast %138 : vector<8x1xf32> to vector<8x256xf32>
    %141 = arith.mulf %140, %139 : vector<8x256xf32>
    %142 = arith.addf %137, %141 : vector<8x256xf32>
    %143 = vector.extract_strided_slice %82 {offsets = [0, 13], sizes = [8, 1], strides = [1, 1]} : vector<8x48xf32> to vector<8x1xf32>
    %144 = vector.extract_strided_slice %86 {offsets = [0, 21], sizes = [8, 256], strides = [1, 1]} : vector<8x384xf32> to vector<8x256xf32>
    %145 = vector.broadcast %143 : vector<8x1xf32> to vector<8x256xf32>
    %146 = arith.mulf %145, %144 : vector<8x256xf32>
    %147 = arith.addf %142, %146 : vector<8x256xf32>
    %148 = vector.extract_strided_slice %82 {offsets = [0, 16], sizes = [8, 1], strides = [1, 1]} : vector<8x48xf32> to vector<8x1xf32>
    %149 = vector.extract_strided_slice %86 {offsets = [0, 32], sizes = [8, 256], strides = [1, 1]} : vector<8x384xf32> to vector<8x256xf32>
    %150 = vector.broadcast %148 : vector<8x1xf32> to vector<8x256xf32>
    %151 = arith.mulf %150, %149 : vector<8x256xf32>
    %152 = arith.addf %147, %151 : vector<8x256xf32>
    %153 = vector.extract_strided_slice %82 {offsets = [0, 17], sizes = [8, 1], strides = [1, 1]} : vector<8x48xf32> to vector<8x1xf32>
    %154 = vector.extract_strided_slice %86 {offsets = [0, 33], sizes = [8, 256], strides = [1, 1]} : vector<8x384xf32> to vector<8x256xf32>
    %155 = vector.broadcast %153 : vector<8x1xf32> to vector<8x256xf32>
    %156 = arith.mulf %155, %154 : vector<8x256xf32>
    %157 = arith.addf %152, %156 : vector<8x256xf32>
    %158 = vector.extract_strided_slice %82 {offsets = [0, 18], sizes = [8, 1], strides = [1, 1]} : vector<8x48xf32> to vector<8x1xf32>
    %159 = vector.extract_strided_slice %86 {offsets = [0, 34], sizes = [8, 256], strides = [1, 1]} : vector<8x384xf32> to vector<8x256xf32>
    %160 = vector.broadcast %158 : vector<8x1xf32> to vector<8x256xf32>
    %161 = arith.mulf %160, %159 : vector<8x256xf32>
    %162 = arith.addf %157, %161 : vector<8x256xf32>
    %163 = vector.extract_strided_slice %82 {offsets = [0, 19], sizes = [8, 1], strides = [1, 1]} : vector<8x48xf32> to vector<8x1xf32>
    %164 = vector.extract_strided_slice %86 {offsets = [0, 35], sizes = [8, 256], strides = [1, 1]} : vector<8x384xf32> to vector<8x256xf32>
    %165 = vector.broadcast %163 : vector<8x1xf32> to vector<8x256xf32>
    %166 = arith.mulf %165, %164 : vector<8x256xf32>
    %167 = arith.addf %162, %166 : vector<8x256xf32>
    %168 = vector.extract_strided_slice %82 {offsets = [0, 20], sizes = [8, 1], strides = [1, 1]} : vector<8x48xf32> to vector<8x1xf32>
    %169 = vector.extract_strided_slice %86 {offsets = [0, 36], sizes = [8, 256], strides = [1, 1]} : vector<8x384xf32> to vector<8x256xf32>
    %170 = vector.broadcast %168 : vector<8x1xf32> to vector<8x256xf32>
    %171 = arith.mulf %170, %169 : vector<8x256xf32>
    %172 = arith.addf %167, %171 : vector<8x256xf32>
    %173 = vector.extract_strided_slice %82 {offsets = [0, 21], sizes = [8, 1], strides = [1, 1]} : vector<8x48xf32> to vector<8x1xf32>
    %174 = vector.extract_strided_slice %86 {offsets = [0, 37], sizes = [8, 256], strides = [1, 1]} : vector<8x384xf32> to vector<8x256xf32>
    %175 = vector.broadcast %173 : vector<8x1xf32> to vector<8x256xf32>
    %176 = arith.mulf %175, %174 : vector<8x256xf32>
    %177 = arith.addf %172, %176 : vector<8x256xf32>
    %178 = vector.extract_strided_slice %82 {offsets = [0, 24], sizes = [8, 1], strides = [1, 1]} : vector<8x48xf32> to vector<8x1xf32>
    %179 = vector.extract_strided_slice %86 {offsets = [0, 48], sizes = [8, 256], strides = [1, 1]} : vector<8x384xf32> to vector<8x256xf32>
    %180 = vector.broadcast %178 : vector<8x1xf32> to vector<8x256xf32>
    %181 = arith.mulf %180, %179 : vector<8x256xf32>
    %182 = arith.addf %177, %181 : vector<8x256xf32>
    %183 = vector.extract_strided_slice %82 {offsets = [0, 25], sizes = [8, 1], strides = [1, 1]} : vector<8x48xf32> to vector<8x1xf32>
    %184 = vector.extract_strided_slice %86 {offsets = [0, 49], sizes = [8, 256], strides = [1, 1]} : vector<8x384xf32> to vector<8x256xf32>
    %185 = vector.broadcast %183 : vector<8x1xf32> to vector<8x256xf32>
    %186 = arith.mulf %185, %184 : vector<8x256xf32>
    %187 = arith.addf %182, %186 : vector<8x256xf32>
    %188 = vector.extract_strided_slice %82 {offsets = [0, 26], sizes = [8, 1], strides = [1, 1]} : vector<8x48xf32> to vector<8x1xf32>
    %189 = vector.extract_strided_slice %86 {offsets = [0, 50], sizes = [8, 256], strides = [1, 1]} : vector<8x384xf32> to vector<8x256xf32>
    %190 = vector.broadcast %188 : vector<8x1xf32> to vector<8x256xf32>
    %191 = arith.mulf %190, %189 : vector<8x256xf32>
    %192 = arith.addf %187, %191 : vector<8x256xf32>
    %193 = vector.extract_strided_slice %82 {offsets = [0, 27], sizes = [8, 1], strides = [1, 1]} : vector<8x48xf32> to vector<8x1xf32>
    %194 = vector.extract_strided_slice %86 {offsets = [0, 51], sizes = [8, 256], strides = [1, 1]} : vector<8x384xf32> to vector<8x256xf32>
    %195 = vector.broadcast %193 : vector<8x1xf32> to vector<8x256xf32>
    %196 = arith.mulf %195, %194 : vector<8x256xf32>
    %197 = arith.addf %192, %196 : vector<8x256xf32>
    %198 = vector.extract_strided_slice %82 {offsets = [0, 28], sizes = [8, 1], strides = [1, 1]} : vector<8x48xf32> to vector<8x1xf32>
    %199 = vector.extract_strided_slice %86 {offsets = [0, 52], sizes = [8, 256], strides = [1, 1]} : vector<8x384xf32> to vector<8x256xf32>
    %200 = vector.broadcast %198 : vector<8x1xf32> to vector<8x256xf32>
    %201 = arith.mulf %200, %199 : vector<8x256xf32>
    %202 = arith.addf %197, %201 : vector<8x256xf32>
    %203 = vector.extract_strided_slice %82 {offsets = [0, 29], sizes = [8, 1], strides = [1, 1]} : vector<8x48xf32> to vector<8x1xf32>
    %204 = vector.extract_strided_slice %86 {offsets = [0, 53], sizes = [8, 256], strides = [1, 1]} : vector<8x384xf32> to vector<8x256xf32>
    %205 = vector.broadcast %203 : vector<8x1xf32> to vector<8x256xf32>
    %206 = arith.mulf %205, %204 : vector<8x256xf32>
    %207 = arith.addf %202, %206 : vector<8x256xf32>
    %208 = vector.extract_strided_slice %82 {offsets = [0, 32], sizes = [8, 1], strides = [1, 1]} : vector<8x48xf32> to vector<8x1xf32>
    %209 = vector.extract_strided_slice %86 {offsets = [0, 64], sizes = [8, 256], strides = [1, 1]} : vector<8x384xf32> to vector<8x256xf32>
    %210 = vector.broadcast %208 : vector<8x1xf32> to vector<8x256xf32>
    %211 = arith.mulf %210, %209 : vector<8x256xf32>
    %212 = arith.addf %207, %211 : vector<8x256xf32>
    %213 = vector.extract_strided_slice %82 {offsets = [0, 33], sizes = [8, 1], strides = [1, 1]} : vector<8x48xf32> to vector<8x1xf32>
    %214 = vector.extract_strided_slice %86 {offsets = [0, 65], sizes = [8, 256], strides = [1, 1]} : vector<8x384xf32> to vector<8x256xf32>
    %215 = vector.broadcast %213 : vector<8x1xf32> to vector<8x256xf32>
    %216 = arith.mulf %215, %214 : vector<8x256xf32>
    %217 = arith.addf %212, %216 : vector<8x256xf32>
    %218 = vector.extract_strided_slice %82 {offsets = [0, 34], sizes = [8, 1], strides = [1, 1]} : vector<8x48xf32> to vector<8x1xf32>
    %219 = vector.extract_strided_slice %86 {offsets = [0, 66], sizes = [8, 256], strides = [1, 1]} : vector<8x384xf32> to vector<8x256xf32>
    %220 = vector.broadcast %218 : vector<8x1xf32> to vector<8x256xf32>
    %221 = arith.mulf %220, %219 : vector<8x256xf32>
    %222 = arith.addf %217, %221 : vector<8x256xf32>
    %223 = vector.extract_strided_slice %82 {offsets = [0, 35], sizes = [8, 1], strides = [1, 1]} : vector<8x48xf32> to vector<8x1xf32>
    %224 = vector.extract_strided_slice %86 {offsets = [0, 67], sizes = [8, 256], strides = [1, 1]} : vector<8x384xf32> to vector<8x256xf32>
    %225 = vector.broadcast %223 : vector<8x1xf32> to vector<8x256xf32>
    %226 = arith.mulf %225, %224 : vector<8x256xf32>
    %227 = arith.addf %222, %226 : vector<8x256xf32>
    %228 = vector.extract_strided_slice %82 {offsets = [0, 36], sizes = [8, 1], strides = [1, 1]} : vector<8x48xf32> to vector<8x1xf32>
    %229 = vector.extract_strided_slice %86 {offsets = [0, 68], sizes = [8, 256], strides = [1, 1]} : vector<8x384xf32> to vector<8x256xf32>
    %230 = vector.broadcast %228 : vector<8x1xf32> to vector<8x256xf32>
    %231 = arith.mulf %230, %229 : vector<8x256xf32>
    %232 = arith.addf %227, %231 : vector<8x256xf32>
    %233 = vector.extract_strided_slice %82 {offsets = [0, 37], sizes = [8, 1], strides = [1, 1]} : vector<8x48xf32> to vector<8x1xf32>
    %234 = vector.extract_strided_slice %86 {offsets = [0, 69], sizes = [8, 256], strides = [1, 1]} : vector<8x384xf32> to vector<8x256xf32>
    %235 = vector.broadcast %233 : vector<8x1xf32> to vector<8x256xf32>
    %236 = arith.mulf %235, %234 : vector<8x256xf32>
    %237 = arith.addf %232, %236 : vector<8x256xf32>
    %238 = vector.extract_strided_slice %82 {offsets = [0, 40], sizes = [8, 1], strides = [1, 1]} : vector<8x48xf32> to vector<8x1xf32>
    %239 = vector.extract_strided_slice %86 {offsets = [0, 80], sizes = [8, 256], strides = [1, 1]} : vector<8x384xf32> to vector<8x256xf32>
    %240 = vector.broadcast %238 : vector<8x1xf32> to vector<8x256xf32>
    %241 = arith.mulf %240, %239 : vector<8x256xf32>
    %242 = arith.addf %237, %241 : vector<8x256xf32>
    %243 = vector.extract_strided_slice %82 {offsets = [0, 41], sizes = [8, 1], strides = [1, 1]} : vector<8x48xf32> to vector<8x1xf32>
    %244 = vector.extract_strided_slice %86 {offsets = [0, 81], sizes = [8, 256], strides = [1, 1]} : vector<8x384xf32> to vector<8x256xf32>
    %245 = vector.broadcast %243 : vector<8x1xf32> to vector<8x256xf32>
    %246 = arith.mulf %245, %244 : vector<8x256xf32>
    %247 = arith.addf %242, %246 : vector<8x256xf32>
    %248 = vector.extract_strided_slice %82 {offsets = [0, 42], sizes = [8, 1], strides = [1, 1]} : vector<8x48xf32> to vector<8x1xf32>
    %249 = vector.extract_strided_slice %86 {offsets = [0, 82], sizes = [8, 256], strides = [1, 1]} : vector<8x384xf32> to vector<8x256xf32>
    %250 = vector.broadcast %248 : vector<8x1xf32> to vector<8x256xf32>
    %251 = arith.mulf %250, %249 : vector<8x256xf32>
    %252 = arith.addf %247, %251 : vector<8x256xf32>
    %253 = vector.extract_strided_slice %82 {offsets = [0, 43], sizes = [8, 1], strides = [1, 1]} : vector<8x48xf32> to vector<8x1xf32>
    %254 = vector.extract_strided_slice %86 {offsets = [0, 83], sizes = [8, 256], strides = [1, 1]} : vector<8x384xf32> to vector<8x256xf32>
    %255 = vector.broadcast %253 : vector<8x1xf32> to vector<8x256xf32>
    %256 = arith.mulf %255, %254 : vector<8x256xf32>
    %257 = arith.addf %252, %256 : vector<8x256xf32>
    %258 = vector.extract_strided_slice %82 {offsets = [0, 44], sizes = [8, 1], strides = [1, 1]} : vector<8x48xf32> to vector<8x1xf32>
    %259 = vector.extract_strided_slice %86 {offsets = [0, 84], sizes = [8, 256], strides = [1, 1]} : vector<8x384xf32> to vector<8x256xf32>
    %260 = vector.broadcast %258 : vector<8x1xf32> to vector<8x256xf32>
    %261 = arith.mulf %260, %259 : vector<8x256xf32>
    %262 = arith.addf %257, %261 : vector<8x256xf32>
    %263 = vector.extract_strided_slice %82 {offsets = [0, 45], sizes = [8, 1], strides = [1, 1]} : vector<8x48xf32> to vector<8x1xf32>
    %264 = vector.extract_strided_slice %86 {offsets = [0, 85], sizes = [8, 256], strides = [1, 1]} : vector<8x384xf32> to vector<8x256xf32>
    %265 = vector.broadcast %263 : vector<8x1xf32> to vector<8x256xf32>
    %266 = arith.mulf %265, %264 : vector<8x256xf32>
    %267 = arith.addf %262, %266 : vector<8x256xf32>
    %cst_48 = arith.constant dense<0.000000e+00> : vector<256xf32>
    %268 = vector.multi_reduction <add>, %267, %cst_48 [0] : vector<8x256xf32> to vector<256xf32>
    %269 = vector.shape_cast %268 : vector<256xf32> to vector<1x256xf32>
    %c0_49 = arith.constant 0 : index
    %270 = memref.load %arg1[%c0_49] : memref<2xf32, #tpu.memory_space<smem>>
    %271 = vector.broadcast %270 : f32 to vector<1x256xf32>
    %272 = arith.mulf %269, %271 : vector<1x256xf32>
    %c1_50 = arith.constant 1 : index
    %273 = memref.load %arg1[%c1_50] : memref<2xf32, #tpu.memory_space<smem>>
    %274 = vector.broadcast %273 : f32 to vector<1x256xf32>
    %275 = arith.addf %272, %274 : vector<1x256xf32>
    %c0_51 = arith.constant 0 : index
    %c0_52 = arith.constant 0 : index
    %c0_53 = arith.constant 0 : index
    %276 = vector.load %arg6[%c0_51, %c0_52, %c0_53] : memref<1x1x256xf32, #tpu.memory_space<vmem>>, vector<1x1x256xf32>
    %277 = vector.shape_cast %276 : vector<1x1x256xf32> to vector<1x256xf32>
    %278 = vector.shape_cast %275 : vector<1x256xf32> to vector<1x1x256xf32>
    tpu.vector_store %arg6[%c0_51, %c0_52, %c0_53], %278 {strides = array<i32>} : memref<1x1x256xf32, #tpu.memory_space<vmem>>, vector<1x1x256xf32>,
    return
  }
  func.func @transform_0(%arg0: i32) -> i32 {
    %c0_i32 = arith.constant 0 : i32
    %c0_i32_0 = arith.constant 0 : i32
    return %c0_i32 : i32
  }
  func.func @transform_1(%arg0: i32) -> (i32, i32, i32) {
    %c0_i32 = arith.constant 0 : i32
    %c0_i32_0 = arith.constant 0 : i32
    %c0_i32_1 = arith.constant 0 : i32
    %c0_i32_2 = arith.constant 0 : i32
    return %c0_i32, %c0_i32_0, %c0_i32_1 : i32, i32, i32
  }
  func.func @transform_2(%arg0: i32) -> (i32, i32) {
    %c0_i32 = arith.constant 0 : i32
    %c0_i32_0 = arith.constant 0 : i32
    %c0_i32_1 = arith.constant 0 : i32
    return %c0_i32, %c0_i32_0 : i32, i32
  }
  func.func @transform_3(%arg0: i32) -> (i32, i32, i32) {
    %c0_i32 = arith.constant 0 : i32
    %c0_i32_0 = arith.constant 0 : i32
    %c0_i32_1 = arith.constant 0 : i32
    return %arg0, %c0_i32, %c0_i32_0 : i32, i32, i32
  }
  func.func @transform_4(%arg0: i32) -> (i32, i32, i32) {
    %c0_i32 = arith.constant 0 : i32
    %c0_i32_0 = arith.constant 0 : i32
    %c0_i32_1 = arith.constant 0 : i32
    return %arg0, %c0_i32, %c0_i32_0 : i32, i32, i32
  }
  func.func @transform_5(%arg0: i32) -> (i32, i32, i32) {
    %c0_i32 = arith.constant 0 : i32
    %c0_i32_0 = arith.constant 0 : i32
    %c0_i32_1 = arith.constant 0 : i32
    return %arg0, %c0_i32, %c0_i32_0 : i32, i32, i32
  }
}

</mosaic_0001>

<llo_original>
// kernel: siamese_forward.1
$region0: #{siamese_forward.1}
  #allocation0 [shape = 'u32[]', space=smem, size = 0x4, offset = 0x4, fixed_abs, tag = 'smem constant byte address 0x4 - core index']
  #allocation1 [shape = 'u32[72,128]{1,0:T(1,128)}', space=vmem, size = 0x9000, scoped, tag = 'internal scratch']
  %s0 = inlined_call_operand.vmem [shape: f32[2], index: 0, kind: input, shape index: {}]
  %s1 = inlined_call_operand.vmem [shape: bf16[9,8,3], index: 1, kind: input, shape index: {}]
  %s2 = inlined_call_operand.vmem [shape: f32[8,1], index: 2, kind: input, shape index: {}]
  %s3 = inlined_call_operand.vmem [shape: bf16[2,3,128], index: 3, kind: input, shape index: {}]
  %s4 = inlined_call_operand.vmem [shape: bf16[2,3,512], index: 4, kind: input, shape index: {}]
  %s5 = inlined_call_operand.vmem [shape: f32[2,1,256], index: 5, kind: output, shape index: {}]
  %s6 = sld [smem:[#allocation0]]
  $region57: #{siamese_forward.1} parent=0
    _
  %s8 = ssub.s32 1, %s6
  %s9 = scalar_select 0, %s8, %s6
  $region1: #{siamese_forward.1} parent=0
    #allocation2 [shape = 'u8[512]{0}', space=smem, size = 0x200, scoped, tag = 'input window, operand 0, single buffered']
    #allocation3 [shape = 's32[2]{0}', space=sflag, size = 0x8, scoped, tag = 'scoped memory for siamese_forward.1']
    %10 = vsyncpa [#allocation3], 0
    loop: start=0, step=1, limit=4
    $region2: #{siamese_forward.1} parent=1 // loop_pre_header
      _
    $region3: #{siamese_forward.1} parent=1 // loop_header
      %s12 = sphi 0, %s16
      %p13 = scmp.ge.s32.totalorder %s12, 4
      %s20 = sphi 0, %s20
      %s22 = sphi 0, %s20
      %s23 = sphi 0, %s22
      %s37 = sphi 0, %s23
      %s41 = sphi 0, %s41
      %s43 = sphi 0, %s41
      %s44 = sphi 0, %s43
      %s58 = sphi 0, %s44
      %s62 = sphi 0, %s62
      %s64 = sphi 0, %s62
      %s65 = sphi 0, %s64
      %s79 = sphi 0, %s65
      %s85 = sphi 0, %s87
      %s88 = sphi 0, %s85
      %s89 = sphi 0, %s88
      %s105 = sphi 0, %s89
      %s111 = sphi 0, %s113
      %s114 = sphi 0, %s111
      %s115 = sphi 0, %s114
      %s131 = sphi 0, %s115
      %s137 = sphi 0, %s139
      %s140 = sphi 0, %s137
      %s141 = sphi 0, %s140
      %s157 = sphi 0, %s141
    $region4: #{siamese_forward.1} parent=1 // loop_header_branch
      %15 = sbr.rel (%p13) target = $region8
    $region5: #{siamese_forward.1} parent=1 // loop_body
      %s17 = ssub.s32 %s12, 1
      %s18 = ssub.s32 %s12, 2
      %s19 = sadd.s32 %s12, 1
      %s21 = sadd.s32 %s20, 1
      %p24 = scmp.eq.s32.totalorder %s12, 1
      %p25 = scmp.ne.s32.totalorder %s20, %s22
      %p26 = scmp.eq.s32.totalorder %s12, 0
      %p27 = por %p25, %p26
      %p28 = scmp.ne.s32.totalorder %s20, %s22
      %p29 = scmp.eq.s32.totalorder %s17, 1
      %p30 = por %p28, %p29
      %p31 = scmp.ne.s32.totalorder %s22, %s23
      %p32 = scmp.eq.s32.totalorder %s17, 0
      %p33 = por %p31, %p32
      %p34 = scmp.ne.s32.totalorder %s22, %s23
      %p35 = scmp.eq.s32.totalorder %s18, 1
      %p36 = por %p34, %p35
      %p38 = scmp.ne.s32.totalorder %s23, %s37
      %p39 = scmp.eq.s32.totalorder %s18, 0
      %p40 = por %p38, %p39
      %s42 = sadd.s32 %s41, 1
      %p45 = scmp.eq.s32.totalorder %s12, 1
      %p46 = scmp.ne.s32.totalorder %s41, %s43
      %p47 = scmp.eq.s32.totalorder %s12, 0
      %p48 = por %p46, %p47
      %p49 = scmp.ne.s32.totalorder %s41, %s43
      %p50 = scmp.eq.s32.totalorder %s17, 1
      %p51 = por %p49, %p50
      %p52 = scmp.ne.s32.totalorder %s43, %s44
      %p53 = scmp.eq.s32.totalorder %s17, 0
      %p54 = por %p52, %p53
      %p55 = scmp.ne.s32.totalorder %s43, %s44
      %p56 = scmp.eq.s32.totalorder %s18, 1
      %p57 = por %p55, %p56
      %p59 = scmp.ne.s32.totalorder %s44, %s58
      %p60 = scmp.eq.s32.totalorder %s18, 0
      %p61 = por %p59, %p60
      %s63 = sadd.s32 %s62, 1
      %p66 = scmp.eq.s32.totalorder %s12, 1
      %p67 = scmp.ne.s32.totalorder %s62, %s64
      %p68 = scmp.eq.s32.totalorder %s12, 0
      %p69 = por %p67, %p68
      %p70 = scmp.ne.s32.totalorder %s62, %s64
      %p71 = scmp.eq.s32.totalorder %s17, 1
      %p72 = por %p70, %p71
      %p73 = scmp.ne.s32.totalorder %s64, %s65
      %p74 = scmp.eq.s32.totalorder %s17, 0
      %p75 = por %p73, %p74
      %p76 = scmp.ne.s32.totalorder %s64, %s65
      %p77 = scmp.eq.s32.totalorder %s18, 1
      %p78 = por %p76, %p77
      %p80 = scmp.ne.s32.totalorder %s65, %s79
      %p81 = scmp.eq.s32.totalorder %s18, 0
      %p82 = por %p80, %p81
      %s83 = ssub.s32 %s12, %s19
      %p84 = scmp.eq.s32.totalorder %s83, 0
      %s86 = sadd.s32 %s85, 1
      %s87 = scalar_select %p84, %s85, %s86
      %p90 = pneg %p84
      %p91 = scmp.eq.s32.totalorder %s12, 1
      %p92 = por %p90, %p91
      %p93 = scmp.ne.s32.totalorder %s85, %s88
      %p94 = scmp.eq.s32.totalorder %s12, 0
      %p95 = por %p93, %p94
      %p96 = scmp.ne.s32.totalorder %s85, %s88
      %p97 = scmp.eq.s32.totalorder %s17, 1
      %p98 = por %p96, %p97
      %p99 = scmp.ne.s32.totalorder %s88, %s89
      %p100 = scmp.eq.s32.totalorder %s17, 0
      %p101 = por %p99, %p100
      %p102 = scmp.ne.s32.totalorder %s88, %s89
      %p103 = scmp.eq.s32.totalorder %s18, 1
      %p104 = por %p102, %p103
      %p106 = scmp.ne.s32.totalorder %s89, %s105
      %p107 = scmp.eq.s32.totalorder %s18, 0
      %p108 = por %p106, %p107
      %s109 = ssub.s32 %s12, %s19
      %p110 = scmp.eq.s32.totalorder %s109, 0
      %s112 = sadd.s32 %s111, 1
      %s113 = scalar_select %p110, %s111, %s112
      %p116 = pneg %p110
      %p117 = scmp.eq.s32.totalorder %s12, 1
      %p118 = por %p116, %p117
      %p119 = scmp.ne.s32.totalorder %s111, %s114
      %p120 = scmp.eq.s32.totalorder %s12, 0
      %p121 = por %p119, %p120
      %p122 = scmp.ne.s32.totalorder %s111, %s114
      %p123 = scmp.eq.s32.totalorder %s17, 1
      %p124 = por %p122, %p123
      %p125 = scmp.ne.s32.totalorder %s114, %s115
      %p126 = scmp.eq.s32.totalorder %s17, 0
      %p127 = por %p125, %p126
      %p128 = scmp.ne.s32.totalorder %s114, %s115
      %p129 = scmp.eq.s32.totalorder %s18, 1
      %p130 = por %p128, %p129
      %p132 = scmp.ne.s32.totalorder %s115, %s131
      %p133 = scmp.eq.s32.totalorder %s18, 0
      %p134 = por %p132, %p133
      %s135 = ssub.s32 %s12, %s19
      %p136 = scmp.eq.s32.totalorder %s135, 0
      %s138 = sadd.s32 %s137, 1
      %s139 = scalar_select %p136, %s137, %s138
      %p142 = pneg %p136
      %p143 = scmp.eq.s32.totalorder %s12, 1
      %p144 = por %p142, %p143
      %p145 = scmp.ne.s32.totalorder %s137, %s140
      %p146 = scmp.eq.s32.totalorder %s12, 0
      %p147 = por %p145, %p146
      %p148 = scmp.ne.s32.totalorder %s137, %s140
      %p149 = scmp.eq.s32.totalorder %s17, 1
      %p150 = por %p148, %p149
      %p151 = scmp.ne.s32.totalorder %s140, %s141
      %p152 = scmp.eq.s32.totalorder %s17, 0
      %p153 = por %p151, %p152
      %p154 = scmp.ne.s32.totalorder %s140, %s141
      %p155 = scmp.eq.s32.totalorder %s18, 1
      %p156 = por %p154, %p155
      %p158 = scmp.ne.s32.totalorder %s141, %s157
      %p159 = scmp.eq.s32.totalorder %s18, 0
      %p160 = por %p158, %p159
      %p161 = scmp.le.s32.totalorder 1, %s12
      %p162 = scmp.lt.s32.totalorder %s12, 3
      %p163 = pnand %p161, %p162
      %p164 = pneg %p163
      // Predicated region
      $region9: #{siamese_forward.1} parent=5 // pred_check
        _
      $region10: #{siamese_forward.1} parent=5 // pred_check_branch
        %166 = sbr.rel (%p163) target = $region12
      $region11: #{siamese_forward.1} parent=5 // pred_region
        %s167 = ssub.s32 %s12, 1
        // Predicated region
        $region13: #{siamese_forward.1} parent=11 // pred_check
          %p168 = pneg %p33
        $region14: #{siamese_forward.1} parent=11 // pred_check_branch
          %170 = sbr.rel (%p168) target = $region16
        $region15: #{siamese_forward.1} parent=11 // pred_region
          %172 = vsyncadd [#allocation3], 0
          %s174 = sshll.u32 %s0, 4
          %s175 = int_to_ptr.vmem [resolvable:$true] %s174
          %177 = dma.vmem_to_smem %s175, 16, [#allocation2], [#allocation3]
        $region16: #{siamese_forward.1} parent=11 // pred_fallthru
          _
        // Predicated region
        $region17: #{siamese_forward.1} parent=11 // pred_check
          %p178 = pneg %p54
        $region18: #{siamese_forward.1} parent=11 // pred_check_branch
          %180 = sbr.rel (%p178) target = $region20
        $region19: #{siamese_forward.1} parent=11 // pred_region
          _
        $region20: #{siamese_forward.1} parent=11 // pred_fallthru
          _
        // Predicated region
        $region21: #{siamese_forward.1} parent=11 // pred_check
          %p181 = pneg %p75
        $region22: #{siamese_forward.1} parent=11 // pred_check_branch
          %183 = sbr.rel (%p181) target = $region24
        $region23: #{siamese_forward.1} parent=11 // pred_region
          _
        $region24: #{siamese_forward.1} parent=11 // pred_fallthru
          _
      $region12: #{siamese_forward.1} parent=5 // pred_fallthru
        _
      %p184 = scmp.lt.s32.totalorder %s12, 2
      // Predicated region
      $region25: #{siamese_forward.1} parent=5 // pred_check
        %p185 = pneg %p184
      $region26: #{siamese_forward.1} parent=5 // pred_check_branch
        %187 = sbr.rel (%p185) target = $region28
      $region27: #{siamese_forward.1} parent=5 // pred_region
        // Predicated region
        $region29: #{siamese_forward.1} parent=27 // pred_check
          %p188 = pneg %p95
        $region30: #{siamese_forward.1} parent=27 // pred_check_branch
          %190 = sbr.rel (%p188) target = $region32
        $region31: #{siamese_forward.1} parent=27 // pred_region
          %p191 = scmp.lt.s32.totalorder %s12, 1
          %s192 = scalar_select %p191, %s12, 1
          %s193 = smul.addr %s192, 2
          %s194 = scalar_lea.vmem %s3, %s193
        $region32: #{siamese_forward.1} parent=27 // pred_fallthru
          _
        // Predicated region
        $region33: #{siamese_forward.1} parent=27 // pred_check
          %p195 = pneg %p121
        $region34: #{siamese_forward.1} parent=27 // pred_check_branch
          %197 = sbr.rel (%p195) target = $region36
        $region35: #{siamese_forward.1} parent=27 // pred_region
          %p198 = scmp.lt.s32.totalorder %s12, 1
          %s199 = scalar_select %p198, %s12, 1
          %s200 = smul.addr %s199, 4
          %s201 = smul.addr %s200, 2
          %s202 = scalar_lea.vmem %s4, %s201
        $region36: #{siamese_forward.1} parent=27 // pred_fallthru
          _
      $region28: #{siamese_forward.1} parent=5 // pred_fallthru
        _
      %p203 = scmp.le.s32.totalorder 1, %s12
      %p204 = scmp.lt.s32.totalorder %s12, 3
      %p205 = pnand %p203, %p204
      %p206 = pneg %p205
      // Predicated region
      $region37: #{siamese_forward.1} parent=5 // pred_check
        _
      $region38: #{siamese_forward.1} parent=5 // pred_check_branch
        %208 = sbr.rel (%p205) target = $region40
      $region39: #{siamese_forward.1} parent=5 // pred_region
        %s209 = ssub.s32 %s12, 1
        // Predicated region
        $region41: #{siamese_forward.1} parent=39 // pred_check
          %p210 = pneg %p33
        $region42: #{siamese_forward.1} parent=39 // pred_check_branch
          %212 = sbr.rel (%p210) target = $region44
        $region43: #{siamese_forward.1} parent=39 // pred_region
          %214 = dma.done [#allocation3], 16
        $region44: #{siamese_forward.1} parent=39 // pred_fallthru
          _
        %215 = sfence
        %p216 = pneg %p33
        %p217 = pneg %p30
        %p218 = pneg %p54
        %p219 = pneg %p51
        %p220 = pneg %p75
        %p221 = pneg %p72
        %p222 = scmp.lt.s32.totalorder %s17, 1
        %s223 = scalar_select %p222, %s17, 1
        %s224 = smul.addr %s223, 2
        %s225 = scalar_lea.vmem %s3, %s224
        %p226 = pneg %p101
        %p227 = pneg %p98
        %p228 = scmp.lt.s32.totalorder %s17, 1
        %s229 = scalar_select %p228, %s17, 1
        %s230 = smul.addr %s229, 4
        %s231 = smul.addr %s230, 2
        %s232 = scalar_lea.vmem %s4, %s231
        %p233 = pneg %p127
        %p234 = pneg %p124
        %p235 = pneg %p153
        %p236 = pneg %p150
        %p237 = scmp.lt.s32.totalorder %s17, 1
        %s238 = scalar_select %p237, %s17, 1
        %s239 = smul.addr %s238, 2
        %s240 = scalar_lea.vmem %s5, %s239
        %p241 = scmp.lt.s32.totalorder %s17, 1
        %s242 = scalar_select %p241, %s17, 1
        %s243 = smul.addr %s242, 2
        %s244 = scalar_lea.vmem %s3, %s243
        %p245 = scmp.lt.s32.totalorder %s17, 1
        %s246 = scalar_select %p245, %s17, 1
        %s247 = smul.addr %s246, 4
        %s248 = smul.addr %s247, 2
        %s249 = scalar_lea.vmem %s4, %s248
        %p250 = scmp.lt.s32.totalorder %s17, 1
        %s251 = scalar_select %p250, %s17, 1
        %s252 = smul.addr %s251, 2
        %s253 = scalar_lea.vmem %s5, %s252
        %v255 = vld [vmem:[%s244] sm:$0x3]
        %v256 = vld [vmem:[%s249] sm:$0xff]
        %v257 = vld [vmem:[%s2] sm:$0xff]
        %v258 = vld [vmem:[%s1] sm:$0xf]
        %s259 = scalar_lea.vmem %s1, 4
        %v260 = vld [vmem:[%s259] sm:$0xf]
        %262 = vst [vmem:[#allocation1] ss:$4 sm:$0xff] %v255
        %v263 = vld.sshfl [vmem:[#allocation1] sm:$0xff pattern:$0x73625140]
        %265 = vrot.lane.b32.xlu0 %v263, 127
        %v266 = vpop.permute.xlu0 %265
        %vm267 = vcmask 23552
        %v269 = vsel %vm267, %v260, 0
        %vm271 = vcmask 1040384
        %vm272 = vcmask 1041408
        %v273 = vsel %vm271, 4294967295, 65535
        %v274 = vsel %vm272, %v273, 0
        %v276 = vand.u32 %v266, %v274
        %278 = vmatpush.bf16.msra.mxu0 0
        %279 = vmatpush.bf16.msra.mxu0 0
        %280 = vmatpush.bf16.msra.mxu0 0
        %281 = vmatpush.bf16.msra.mxu0 0
        %282 = vmatpush.bf16.msra.mxu0 0
        %283 = vmatpush.bf16.msra.mxu0 0
        %284 = vmatpush.bf16.msra.mxu0 0
        %285 = vmatpush.bf16.msra.mxu0 %v276
        %286 = vmatmul.bf16.gmra.mxu0 %v269
        %v287 = vpop.f32.mrf.mxu0
        %v288 = vadd.f32 0.0, %v287
        %v289 = vpop.f32.mrf.mxu0
        %290 = vdwg.mxu0
        %v292 = vsel %vm267, %v258, 0
        %v294 = vand.u32 %v255, %v274
        %296 = vmatpush.bf16.msra.mxu0 0
        %297 = vmatpush.bf16.msra.mxu0 0
        %298 = vmatpush.bf16.msra.mxu0 0
        %299 = vmatpush.bf16.msra.mxu0 0
        %300 = vmatpush.bf16.msra.mxu0 0
        %301 = vmatpush.bf16.msra.mxu0 0
        %302 = vmatpush.bf16.msra.mxu0 0
        %303 = vmatpush.bf16.msra.mxu0 %v294
        %304 = vmatmul.bf16.gmra.mxu0 %v292
        %v305 = vpop.f32.mrf.mxu0
        %v306 = vadd.f32 %v288, %v305
        %v307 = vpop.f32.mrf.mxu0
        %308 = vdwg.mxu0
        %310 = vst [vmem:[#allocation1] ss:$4 sm:$0xff] %v256
        %v311 = vld.sshfl [vmem:[#allocation1] sm:$0xff pattern:$0x73625140]
        %v313 = vld.sshfl [vmem:[#allocation1 + $0x8] sm:$0xff pattern:$0x73625140]
        %v315 = vld.sshfl [vmem:[#allocation1 + $0x10] sm:$0xff pattern:$0x73625140]
        %v317 = vld.sshfl [vmem:[#allocation1 + $0x18] sm:$0xff pattern:$0x73625140]
        %319 = vrot.lane.b32.xlu0 %v311, 127
        %v320 = vpop.permute.xlu0 %319
        %321 = vrot.lane.b32.xlu0 %v313, 127
        %v322 = vpop.permute.xlu0 %321
        %323 = vrot.lane.b32.xlu0 %v315, 127
        %v324 = vpop.permute.xlu0 %323
        %325 = vrot.lane.b32.xlu0 %v317, 127
        %v326 = vpop.permute.xlu0 %325
        %vm327 = vcmask 1039360
        %v328 = vsel %vm327, %v320, %v322
        %v329 = vsel %vm327, %v322, %v324
        %v330 = vsel %vm327, %v324, %v326
        %v332 = vand.u32 %v328, %v274
        %v335 = vand.u32 %v329, %v274
        %v338 = vand.u32 %v330, %v274
        %340 = vmatpush.bf16.msra.mxu0 0
        %341 = vmatpush.bf16.msra.mxu0 0
        %342 = vmatpush.bf16.msra.mxu0 0
        %343 = vmatpush.bf16.msra.mxu0 0
        %344 = vmatpush.bf16.msra.mxu0 0
        %345 = vmatpush.bf16.msra.mxu0 0
        %346 = vmatpush.bf16.msra.mxu0 0
        %347 = vmatpush.bf16.msra.mxu0 %v332
        %348 = vmatmul.bf16.gmra.mxu0 %v269
        %v349 = vpop.f32.mrf.mxu0
        %v350 = vadd.f32 0.0, %v349
        %v351 = vpop.f32.mrf.mxu0
        %352 = vdwg.mxu0
        %353 = vmatpush.bf16.msra.mxu0 0
        %354 = vmatpush.bf16.msra.mxu0 0
        %355 = vmatpush.bf16.msra.mxu0 0
        %356 = vmatpush.bf16.msra.mxu0 0
        %357 = vmatpush.bf16.msra.mxu0 0
        %358 = vmatpush.bf16.msra.mxu0 0
        %359 = vmatpush.bf16.msra.mxu0 0
        %360 = vmatpush.bf16.msra.mxu0 %v335
        %361 = vmatmul.bf16.gmra.mxu0 %v269
        %v362 = vpop.f32.mrf.mxu0
        %v363 = vadd.f32 0.0, %v362
        %v364 = vpop.f32.mrf.mxu0
        %365 = vdwg.mxu0
        %366 = vmatpush.bf16.msra.mxu0 0
        %367 = vmatpush.bf16.msra.mxu0 0
        %368 = vmatpush.bf16.msra.mxu0 0
        %369 = vmatpush.bf16.msra.mxu0 0
        %370 = vmatpush.bf16.msra.mxu0 0
        %371 = vmatpush.bf16.msra.mxu0 0
        %372 = vmatpush.bf16.msra.mxu0 0
        %373 = vmatpush.bf16.msra.mxu0 %v338
        %374 = vmatmul.bf16.gmra.mxu0 %v269
        %v375 = vpop.f32.mrf.mxu0
        %v376 = vadd.f32 0.0, %v375
        %v377 = vpop.f32.mrf.mxu0
        %378 = vdwg.mxu0
        %379 = vst [vmem:[#allocation1] ss:$4 sm:$0xff] %v256
        %v380 = vld.sshfl [vmem:[#allocation1] sm:$0xff pattern:$0x73625140]
        %v381 = vld.sshfl [vmem:[#allocation1 + $0x8] sm:$0xff pattern:$0x73625140]
        %v382 = vld.sshfl [vmem:[#allocation1 + $0x10] sm:$0xff pattern:$0x73625140]
        %v383 = vand.u32 %v380, %v274
        %v385 = vand.u32 %v381, %v274
        %v387 = vand.u32 %v382, %v274
        %389 = vmatpush.bf16.msra.mxu0 0
        %390 = vmatpush.bf16.msra.mxu0 0
        %391 = vmatpush.bf16.msra.mxu0 0
        %392 = vmatpush.bf16.msra.mxu0 0
        %393 = vmatpush.bf16.msra.mxu0 0
        %394 = vmatpush.bf16.msra.mxu0 0
        %395 = vmatpush.bf16.msra.mxu0 0
        %396 = vmatpush.bf16.msra.mxu0 %v383
        %397 = vmatmul.bf16.gmra.mxu0 %v292
        %v398 = vpop.f32.mrf.mxu0
        %v399 = vadd.f32 %v350, %v398
        %v400 = vpop.f32.mrf.mxu0
        %401 = vdwg.mxu0
        %402 = vmatpush.bf16.msra.mxu0 0
        %403 = vmatpush.bf16.msra.mxu0 0
        %404 = vmatpush.bf16.msra.mxu0 0
        %405 = vmatpush.bf16.msra.mxu0 0
        %406 = vmatpush.bf16.msra.mxu0 0
        %407 = vmatpush.bf16.msra.mxu0 0
        %408 = vmatpush.bf16.msra.mxu0 0
        %409 = vmatpush.bf16.msra.mxu0 %v385
        %410 = vmatmul.bf16.gmra.mxu0 %v292
        %v411 = vpop.f32.mrf.mxu0
        %v412 = vadd.f32 %v363, %v411
        %v413 = vpop.f32.mrf.mxu0
        %414 = vdwg.mxu0
        %415 = vmatpush.bf16.msra.mxu0 0
        %416 = vmatpush.bf16.msra.mxu0 0
        %417 = vmatpush.bf16.msra.mxu0 0
        %418 = vmatpush.bf16.msra.mxu0 0
        %419 = vmatpush.bf16.msra.mxu0 0
        %420 = vmatpush.bf16.msra.mxu0 0
        %421 = vmatpush.bf16.msra.mxu0 0
        %422 = vmatpush.bf16.msra.mxu0 %v387
        %423 = vmatmul.bf16.gmra.mxu0 %v292
        %v424 = vpop.f32.mrf.mxu0
        %v425 = vadd.f32 %v376, %v424
        %v426 = vpop.f32.mrf.mxu0
        %427 = vdwg.mxu0
        %s428 = scalar_lea.vmem %s1, 8
        %v429 = vld [vmem:[%s428] sm:$0xf]
        %430 = vst [vmem:[#allocation1] ss:$4 sm:$0xff] %v255
        %v431 = vld.sshfl [vmem:[#allocation1] sm:$0xff pattern:$0x73625140]
        %433 = vrot.lane.b32.xlu0 %v431, 126
        %v434 = vpop.permute.xlu0 %433
        %v436 = vsel %vm267, %v429, 0
        %v439 = vand.u32 %v434, %v274
        %441 = vmatpush.bf16.msra.mxu0 0
        %442 = vmatpush.bf16.msra.mxu0 0
        %443 = vmatpush.bf16.msra.mxu0 0
        %444 = vmatpush.bf16.msra.mxu0 0
        %445 = vmatpush.bf16.msra.mxu0 0
        %446 = vmatpush.bf16.msra.mxu0 0
        %447 = vmatpush.bf16.msra.mxu0 0
        %448 = vmatpush.bf16.msra.mxu0 %v439
        %449 = vmatmul.bf16.gmra.mxu0 %v436
        %v450 = vpop.f32.mrf.mxu0
        %v451 = vadd.f32 0.0, %v450
        %v452 = vpop.f32.mrf.mxu0
        %453 = vdwg.mxu0
        %v454 = vadd.f32 %v306, %v451
        %455 = vst [vmem:[#allocation1] ss:$4 sm:$0xff] %v256
        %v456 = vld.sshfl [vmem:[#allocation1] sm:$0xff pattern:$0x73625140]
        %v458 = vld.sshfl [vmem:[#allocation1 + $0x8] sm:$0xff pattern:$0x73625140]
        %v460 = vld.sshfl [vmem:[#allocation1 + $0x10] sm:$0xff pattern:$0x73625140]
        %v462 = vld.sshfl [vmem:[#allocation1 + $0x18] sm:$0xff pattern:$0x73625140]
        %464 = vrot.lane.b32.xlu0 %v456, 126
        %v465 = vpop.permute.xlu0 %464
        %466 = vrot.lane.b32.xlu0 %v458, 126
        %v467 = vpop.permute.xlu0 %466
        %468 = vrot.lane.b32.xlu0 %v460, 126
        %v469 = vpop.permute.xlu0 %468
        %470 = vrot.lane.b32.xlu0 %v462, 126
        %v471 = vpop.permute.xlu0 %470
        %vm472 = vcmask 1031168
        %v473 = vsel %vm472, %v465, %v467
        %v474 = vsel %vm472, %v467, %v469
        %v475 = vsel %vm472, %v469, %v471
        %v477 = vand.u32 %v473, %v274
        %v480 = vand.u32 %v474, %v274
        %v483 = vand.u32 %v475, %v274
        %485 = vmatpush.bf16.msra.mxu0 0
        %486 = vmatpush.bf16.msra.mxu0 0
        %487 = vmatpush.bf16.msra.mxu0 0
        %488 = vmatpush.bf16.msra.mxu0 0
        %489 = vmatpush.bf16.msra.mxu0 0
        %490 = vmatpush.bf16.msra.mxu0 0
        %491 = vmatpush.bf16.msra.mxu0 0
        %492 = vmatpush.bf16.msra.mxu0 %v477
        %493 = vmatmul.bf16.gmra.mxu0 %v436
        %v494 = vpop.f32.mrf.mxu0
        %v495 = vadd.f32 0.0, %v494
        %v496 = vpop.f32.mrf.mxu0
        %497 = vdwg.mxu0
        %498 = vmatpush.bf16.msra.mxu0 0
        %499 = vmatpush.bf16.msra.mxu0 0
        %500 = vmatpush.bf16.msra.mxu0 0
        %501 = vmatpush.bf16.msra.mxu0 0
        %502 = vmatpush.bf16.msra.mxu0 0
        %503 = vmatpush.bf16.msra.mxu0 0
        %504 = vmatpush.bf16.msra.mxu0 0
        %505 = vmatpush.bf16.msra.mxu0 %v480
        %506 = vmatmul.bf16.gmra.mxu0 %v436
        %v507 = vpop.f32.mrf.mxu0
        %v508 = vadd.f32 0.0, %v507
        %v509 = vpop.f32.mrf.mxu0
        %510 = vdwg.mxu0
        %511 = vmatpush.bf16.msra.mxu0 0
        %512 = vmatpush.bf16.msra.mxu0 0
        %513 = vmatpush.bf16.msra.mxu0 0
        %514 = vmatpush.bf16.msra.mxu0 0
        %515 = vmatpush.bf16.msra.mxu0 0
        %516 = vmatpush.bf16.msra.mxu0 0
        %517 = vmatpush.bf16.msra.mxu0 0
        %518 = vmatpush.bf16.msra.mxu0 %v483
        %519 = vmatmul.bf16.gmra.mxu0 %v436
        %v520 = vpop.f32.mrf.mxu0
        %v521 = vadd.f32 0.0, %v520
        %v522 = vpop.f32.mrf.mxu0
        %523 = vdwg.mxu0
        %v524 = vadd.f32 %v399, %v495
        %v525 = vadd.f32 %v412, %v508
        %v526 = vadd.f32 %v425, %v521
        %s527 = scalar_lea.vmem %s1, 12
        %v528 = vld [vmem:[%s527] sm:$0xf]
        %529 = vst [vmem:[#allocation1] ss:$4 sm:$0xff] %v255
        %v530 = vld.sshfl [vmem:[#allocation1] sm:$0xff pattern:$0x73625140]
        %532 = vrot.lane.b32.xlu0 %v530, 120
        %v533 = vpop.permute.xlu0 %532
        %v535 = vsel %vm267, %v528, 0
        %v538 = vand.u32 %v533, %v274
        %540 = vmatpush.bf16.msra.mxu0 0
        %541 = vmatpush.bf16.msra.mxu0 0
        %542 = vmatpush.bf16.msra.mxu0 0
        %543 = vmatpush.bf16.msra.mxu0 0
        %544 = vmatpush.bf16.msra.mxu0 0
        %545 = vmatpush.bf16.msra.mxu0 0
        %546 = vmatpush.bf16.msra.mxu0 0
        %547 = vmatpush.bf16.msra.mxu0 %v538
        %548 = vmatmul.bf16.gmra.mxu0 %v535
        %v549 = vpop.f32.mrf.mxu0
        %v550 = vadd.f32 0.0, %v549
        %v551 = vpop.f32.mrf.mxu0
        %552 = vdwg.mxu0
        %v553 = vadd.f32 %v454, %v550
        %554 = vst [vmem:[#allocation1] ss:$4 sm:$0xff] %v256
        %v555 = vld.sshfl [vmem:[#allocation1] sm:$0xff pattern:$0x73625140]
        %v557 = vld.sshfl [vmem:[#allocation1 + $0x8] sm:$0xff pattern:$0x73625140]
        %v559 = vld.sshfl [vmem:[#allocation1 + $0x10] sm:$0xff pattern:$0x73625140]
        %v561 = vld.sshfl [vmem:[#allocation1 + $0x18] sm:$0xff pattern:$0x73625140]
        %563 = vrot.lane.b32.xlu0 %v555, 112
        %v564 = vpop.permute.xlu0 %563
        %565 = vrot.lane.b32.xlu0 %v557, 112
        %v566 = vpop.permute.xlu0 %565
        %567 = vrot.lane.b32.xlu0 %v559, 112
        %v568 = vpop.permute.xlu0 %567
        %569 = vrot.lane.b32.xlu0 %v561, 112
        %v570 = vpop.permute.xlu0 %569
        %vm571 = vcmask 916480
        %v572 = vsel %vm571, %v564, %v566
        %v573 = vsel %vm571, %v566, %v568
        %v574 = vsel %vm571, %v568, %v570
        %v576 = vand.u32 %v572, %v274
        %v579 = vand.u32 %v573, %v274
        %v582 = vand.u32 %v574, %v274
        %584 = vmatpush.bf16.msra.mxu0 0
        %585 = vmatpush.bf16.msra.mxu0 0
        %586 = vmatpush.bf16.msra.mxu0 0
        %587 = vmatpush.bf16.msra.mxu0 0
        %588 = vmatpush.bf16.msra.mxu0 0
        %589 = vmatpush.bf16.msra.mxu0 0
        %590 = vmatpush.bf16.msra.mxu0 0
        %591 = vmatpush.bf16.msra.mxu0 %v576
        %592 = vmatmul.bf16.gmra.mxu0 %v535
        %v593 = vpop.f32.mrf.mxu0
        %v594 = vadd.f32 0.0, %v593
        %v595 = vpop.f32.mrf.mxu0
        %596 = vdwg.mxu0
        %597 = vmatpush.bf16.msra.mxu0 0
        %598 = vmatpush.bf16.msra.mxu0 0
        %599 = vmatpush.bf16.msra.mxu0 0
        %600 = vmatpush.bf16.msra.mxu0 0
        %601 = vmatpush.bf16.msra.mxu0 0
        %602 = vmatpush.bf16.msra.mxu0 0
        %603 = vmatpush.bf16.msra.mxu0 0
        %604 = vmatpush.bf16.msra.mxu0 %v579
        %605 = vmatmul.bf16.gmra.mxu0 %v535
        %v606 = vpop.f32.mrf.mxu0
        %v607 = vadd.f32 0.0, %v606
        %v608 = vpop.f32.mrf.mxu0
        %609 = vdwg.mxu0
        %610 = vmatpush.bf16.msra.mxu0 0
        %611 = vmatpush.bf16.msra.mxu0 0
        %612 = vmatpush.bf16.msra.mxu0 0
        %613 = vmatpush.bf16.msra.mxu0 0
        %614 = vmatpush.bf16.msra.mxu0 0
        %615 = vmatpush.bf16.msra.mxu0 0
        %616 = vmatpush.bf16.msra.mxu0 0
        %617 = vmatpush.bf16.msra.mxu0 %v582
        %618 = vmatmul.bf16.gmra.mxu0 %v535
        %v619 = vpop.f32.mrf.mxu0
        %v620 = vadd.f32 0.0, %v619
        %v621 = vpop.f32.mrf.mxu0
        %622 = vdwg.mxu0
        %v623 = vadd.f32 %v524, %v594
        %v624 = vadd.f32 %v525, %v607
        %v625 = vadd.f32 %v526, %v620
        %s626 = scalar_lea.vmem %s1, 16
        %v627 = vld [vmem:[%s626] sm:$0xf]
        %628 = vst [vmem:[#allocation1] ss:$4 sm:$0xff] %v255
        %v629 = vld.sshfl [vmem:[#allocation1] sm:$0xff pattern:$0x73625140]
        %631 = vrot.lane.b32.xlu0 %v629, 119
        %v632 = vpop.permute.xlu0 %631
        %v634 = vsel %vm267, %v627, 0
        %v637 = vand.u32 %v632, %v274
        %639 = vmatpush.bf16.msra.mxu0 0
        %640 = vmatpush.bf16.msra.mxu0 0
        %641 = vmatpush.bf16.msra.mxu0 0
        %642 = vmatpush.bf16.msra.mxu0 0
        %643 = vmatpush.bf16.msra.mxu0 0
        %644 = vmatpush.bf16.msra.mxu0 0
        %645 = vmatpush.bf16.msra.mxu0 0
        %646 = vmatpush.bf16.msra.mxu0 %v637
        %647 = vmatmul.bf16.gmra.mxu0 %v634
        %v648 = vpop.f32.mrf.mxu0
        %v649 = vadd.f32 0.0, %v648
        %v650 = vpop.f32.mrf.mxu0
        %651 = vdwg.mxu0
        %v652 = vadd.f32 %v553, %v649
        %653 = vst [vmem:[#allocation1] ss:$4 sm:$0xff] %v256
        %v654 = vld.sshfl [vmem:[#allocation1] sm:$0xff pattern:$0x73625140]
        %v656 = vld.sshfl [vmem:[#allocation1 + $0x8] sm:$0xff pattern:$0x73625140]
        %v658 = vld.sshfl [vmem:[#allocation1 + $0x10] sm:$0xff pattern:$0x73625140]
        %v660 = vld.sshfl [vmem:[#allocation1 + $0x18] sm:$0xff pattern:$0x73625140]
        %662 = vrot.lane.b32.xlu0 %v654, 111
        %v663 = vpop.permute.xlu0 %662
        %664 = vrot.lane.b32.xlu0 %v656, 111
        %v665 = vpop.permute.xlu0 %664
        %666 = vrot.lane.b32.xlu0 %v658, 111
        %v667 = vpop.permute.xlu0 %666
        %668 = vrot.lane.b32.xlu0 %v660, 111
        %v669 = vpop.permute.xlu0 %668
        %vm670 = vcmask 908288
        %v671 = vsel %vm670, %v663, %v665
        %v672 = vsel %vm670, %v665, %v667
        %v673 = vsel %vm670, %v667, %v669
        %v675 = vand.u32 %v671, %v274
        %v678 = vand.u32 %v672, %v274
        %v681 = vand.u32 %v673, %v274
        %683 = vmatpush.bf16.msra.mxu0 0
        %684 = vmatpush.bf16.msra.mxu0 0
        %685 = vmatpush.bf16.msra.mxu0 0
        %686 = vmatpush.bf16.msra.mxu0 0
        %687 = vmatpush.bf16.msra.mxu0 0
        %688 = vmatpush.bf16.msra.mxu0 0
        %689 = vmatpush.bf16.msra.mxu0 0
        %690 = vmatpush.bf16.msra.mxu0 %v675
        %691 = vmatmul.bf16.gmra.mxu0 %v634
        %v692 = vpop.f32.mrf.mxu0
        %v693 = vadd.f32 0.0, %v692
        %v694 = vpop.f32.mrf.mxu0
        %695 = vdwg.mxu0
        %696 = vmatpush.bf16.msra.mxu0 0
        %697 = vmatpush.bf16.msra.mxu0 0
        %698 = vmatpush.bf16.msra.mxu0 0
        %699 = vmatpush.bf16.msra.mxu0 0
        %700 = vmatpush.bf16.msra.mxu0 0
        %701 = vmatpush.bf16.msra.mxu0 0
        %702 = vmatpush.bf16.msra.mxu0 0
        %703 = vmatpush.bf16.msra.mxu0 %v678
        %704 = vmatmul.bf16.gmra.mxu0 %v634
        %v705 = vpop.f32.mrf.mxu0
        %v706 = vadd.f32 0.0, %v705
        %v707 = vpop.f32.mrf.mxu0
        %708 = vdwg.mxu0
        %709 = vmatpush.bf16.msra.mxu0 0
        %710 = vmatpush.bf16.msra.mxu0 0
        %711 = vmatpush.bf16.msra.mxu0 0
        %712 = vmatpush.bf16.msra.mxu0 0
        %713 = vmatpush.bf16.msra.mxu0 0
        %714 = vmatpush.bf16.msra.mxu0 0
        %715 = vmatpush.bf16.msra.mxu0 0
        %716 = vmatpush.bf16.msra.mxu0 %v681
        %717 = vmatmul.bf16.gmra.mxu0 %v634
        %v718 = vpop.f32.mrf.mxu0
        %v719 = vadd.f32 0.0, %v718
        %v720 = vpop.f32.mrf.mxu0
        %721 = vdwg.mxu0
        %v722 = vadd.f32 %v623, %v693
        %v723 = vadd.f32 %v624, %v706
        %v724 = vadd.f32 %v625, %v719
        %s725 = scalar_lea.vmem %s1, 20
        %v726 = vld [vmem:[%s725] sm:$0xf]
        %727 = vst [vmem:[#allocation1] ss:$4 sm:$0xff] %v255
        %v728 = vld.sshfl [vmem:[#allocation1] sm:$0xff pattern:$0x73625140]
        %730 = vrot.lane.b32.xlu0 %v728, 118
        %v731 = vpop.permute.xlu0 %730
        %v733 = vsel %vm267, %v726, 0
        %v736 = vand.u32 %v731, %v274
        %738 = vmatpush.bf16.msra.mxu0 0
        %739 = vmatpush.bf16.msra.mxu0 0
        %740 = vmatpush.bf16.msra.mxu0 0
        %741 = vmatpush.bf16.msra.mxu0 0
        %742 = vmatpush.bf16.msra.mxu0 0
        %743 = vmatpush.bf16.msra.mxu0 0
        %744 = vmatpush.bf16.msra.mxu0 0
        %745 = vmatpush.bf16.msra.mxu0 %v736
        %746 = vmatmul.bf16.gmra.mxu0 %v733
        %v747 = vpop.f32.mrf.mxu0
        %v748 = vadd.f32 0.0, %v747
        %v749 = vpop.f32.mrf.mxu0
        %750 = vdwg.mxu0
        %v751 = vadd.f32 %v652, %v748
        %752 = vst [vmem:[#allocation1] ss:$4 sm:$0xff] %v256
        %v753 = vld.sshfl [vmem:[#allocation1] sm:$0xff pattern:$0x73625140]
        %v755 = vld.sshfl [vmem:[#allocation1 + $0x8] sm:$0xff pattern:$0x73625140]
        %v757 = vld.sshfl [vmem:[#allocation1 + $0x10] sm:$0xff pattern:$0x73625140]
        %v759 = vld.sshfl [vmem:[#allocation1 + $0x18] sm:$0xff pattern:$0x73625140]
        %761 = vrot.lane.b32.xlu0 %v753, 110
        %v762 = vpop.permute.xlu0 %761
        %763 = vrot.lane.b32.xlu0 %v755, 110
        %v764 = vpop.permute.xlu0 %763
        %765 = vrot.lane.b32.xlu0 %v757, 110
        %v766 = vpop.permute.xlu0 %765
        %767 = vrot.lane.b32.xlu0 %v759, 110
        %v768 = vpop.permute.xlu0 %767
        %vm769 = vcmask 900096
        %v770 = vsel %vm769, %v762, %v764
        %v771 = vsel %vm769, %v764, %v766
        %v772 = vsel %vm769, %v766, %v768
        %v774 = vand.u32 %v770, %v274
        %v777 = vand.u32 %v771, %v274
        %v780 = vand.u32 %v772, %v274
        %782 = vmatpush.bf16.msra.mxu0 0
        %783 = vmatpush.bf16.msra.mxu0 0
        %784 = vmatpush.bf16.msra.mxu0 0
        %785 = vmatpush.bf16.msra.mxu0 0
        %786 = vmatpush.bf16.msra.mxu0 0
        %787 = vmatpush.bf16.msra.mxu0 0
        %788 = vmatpush.bf16.msra.mxu0 0
        %789 = vmatpush.bf16.msra.mxu0 %v774
        %790 = vmatmul.bf16.gmra.mxu0 %v733
        %v791 = vpop.f32.mrf.mxu0
        %v792 = vadd.f32 0.0, %v791
        %v793 = vpop.f32.mrf.mxu0
        %794 = vdwg.mxu0
        %795 = vmatpush.bf16.msra.mxu0 0
        %796 = vmatpush.bf16.msra.mxu0 0
        %797 = vmatpush.bf16.msra.mxu0 0
        %798 = vmatpush.bf16.msra.mxu0 0
        %799 = vmatpush.bf16.msra.mxu0 0
        %800 = vmatpush.bf16.msra.mxu0 0
        %801 = vmatpush.bf16.msra.mxu0 0
        %802 = vmatpush.bf16.msra.mxu0 %v777
        %803 = vmatmul.bf16.gmra.mxu0 %v733
        %v804 = vpop.f32.mrf.mxu0
        %v805 = vadd.f32 0.0, %v804
        %v806 = vpop.f32.mrf.mxu0
        %807 = vdwg.mxu0
        %808 = vmatpush.bf16.msra.mxu0 0
        %809 = vmatpush.bf16.msra.mxu0 0
        %810 = vmatpush.bf16.msra.mxu0 0
        %811 = vmatpush.bf16.msra.mxu0 0
        %812 = vmatpush.bf16.msra.mxu0 0
        %813 = vmatpush.bf16.msra.mxu0 0
        %814 = vmatpush.bf16.msra.mxu0 0
        %815 = vmatpush.bf16.msra.mxu0 %v780
        %816 = vmatmul.bf16.gmra.mxu0 %v733
        %v817 = vpop.f32.mrf.mxu0
        %v818 = vadd.f32 0.0, %v817
        %v819 = vpop.f32.mrf.mxu0
        %820 = vdwg.mxu0
        %v821 = vadd.f32 %v722, %v792
        %v822 = vadd.f32 %v723, %v805
        %v823 = vadd.f32 %v724, %v818
        %s824 = scalar_lea.vmem %s1, 24
        %v825 = vld [vmem:[%s824] sm:$0xf]
        %826 = vst [vmem:[#allocation1] ss:$4 sm:$0xff] %v255
        %v827 = vld.sshfl [vmem:[#allocation1] sm:$0xff pattern:$0x73625140]
        %829 = vrot.lane.b32.xlu0 %v827, 112
        %v830 = vpop.permute.xlu0 %829
        %v832 = vsel %vm267, %v825, 0
        %v835 = vand.u32 %v830, %v274
        %837 = vmatpush.bf16.msra.mxu0 0
        %838 = vmatpush.bf16.msra.mxu0 0
        %839 = vmatpush.bf16.msra.mxu0 0
        %840 = vmatpush.bf16.msra.mxu0 0
        %841 = vmatpush.bf16.msra.mxu0 0
        %842 = vmatpush.bf16.msra.mxu0 0
        %843 = vmatpush.bf16.msra.mxu0 0
        %844 = vmatpush.bf16.msra.mxu0 %v835
        %845 = vmatmul.bf16.gmra.mxu0 %v832
        %v846 = vpop.f32.mrf.mxu0
        %v847 = vadd.f32 0.0, %v846
        %v848 = vpop.f32.mrf.mxu0
        %849 = vdwg.mxu0
        %v850 = vadd.f32 %v751, %v847
        %851 = vst [vmem:[#allocation1] ss:$4 sm:$0xff] %v256
        %v852 = vld.sshfl [vmem:[#allocation1] sm:$0xff pattern:$0x73625140]
        %v854 = vld.sshfl [vmem:[#allocation1 + $0x8] sm:$0xff pattern:$0x73625140]
        %v856 = vld.sshfl [vmem:[#allocation1 + $0x10] sm:$0xff pattern:$0x73625140]
        %v858 = vld.sshfl [vmem:[#allocation1 + $0x18] sm:$0xff pattern:$0x73625140]
        %860 = vrot.lane.b32.xlu0 %v852, 96
        %v861 = vpop.permute.xlu0 %860
        %862 = vrot.lane.b32.xlu0 %v854, 96
        %v863 = vpop.permute.xlu0 %862
        %864 = vrot.lane.b32.xlu0 %v856, 96
        %v865 = vpop.permute.xlu0 %864
        %866 = vrot.lane.b32.xlu0 %v858, 96
        %v867 = vpop.permute.xlu0 %866
        %vm868 = vcmask 785408
        %v869 = vsel %vm868, %v861, %v863
        %v870 = vsel %vm868, %v863, %v865
        %v871 = vsel %vm868, %v865, %v867
        %v873 = vand.u32 %v869, %v274
        %v876 = vand.u32 %v870, %v274
        %v879 = vand.u32 %v871, %v274
        %881 = vmatpush.bf16.msra.mxu0 0
        %882 = vmatpush.bf16.msra.mxu0 0
        %883 = vmatpush.bf16.msra.mxu0 0
        %884 = vmatpush.bf16.msra.mxu0 0
        %885 = vmatpush.bf16.msra.mxu0 0
        %886 = vmatpush.bf16.msra.mxu0 0
        %887 = vmatpush.bf16.msra.mxu0 0
        %888 = vmatpush.bf16.msra.mxu0 %v873
        %889 = vmatmul.bf16.gmra.mxu0 %v832
        %v890 = vpop.f32.mrf.mxu0
        %v891 = vadd.f32 0.0, %v890
        %v892 = vpop.f32.mrf.mxu0
        %893 = vdwg.mxu0
        %894 = vmatpush.bf16.msra.mxu0 0
        %895 = vmatpush.bf16.msra.mxu0 0
        %896 = vmatpush.bf16.msra.mxu0 0
        %897 = vmatpush.bf16.msra.mxu0 0
        %898 = vmatpush.bf16.msra.mxu0 0
        %899 = vmatpush.bf16.msra.mxu0 0
        %900 = vmatpush.bf16.msra.mxu0 0
        %901 = vmatpush.bf16.msra.mxu0 %v876
        %902 = vmatmul.bf16.gmra.mxu0 %v832
        %v903 = vpop.f32.mrf.mxu0
        %v904 = vadd.f32 0.0, %v903
        %v905 = vpop.f32.mrf.mxu0
        %906 = vdwg.mxu0
        %907 = vmatpush.bf16.msra.mxu0 0
        %908 = vmatpush.bf16.msra.mxu0 0
        %909 = vmatpush.bf16.msra.mxu0 0
        %910 = vmatpush.bf16.msra.mxu0 0
        %911 = vmatpush.bf16.msra.mxu0 0
        %912 = vmatpush.bf16.msra.mxu0 0
        %913 = vmatpush.bf16.msra.mxu0 0
        %914 = vmatpush.bf16.msra.mxu0 %v879
        %915 = vmatmul.bf16.gmra.mxu0 %v832
        %v916 = vpop.f32.mrf.mxu0
        %v917 = vadd.f32 0.0, %v916
        %v918 = vpop.f32.mrf.mxu0
        %919 = vdwg.mxu0
        %v920 = vadd.f32 %v821, %v891
        %v921 = vadd.f32 %v822, %v904
        %v922 = vadd.f32 %v823, %v917
        %s923 = scalar_lea.vmem %s1, 28
        %v924 = vld [vmem:[%s923] sm:$0xf]
        %925 = vst [vmem:[#allocation1] ss:$4 sm:$0xff] %v255
        %v926 = vld.sshfl [vmem:[#allocation1] sm:$0xff pattern:$0x73625140]
        %928 = vrot.lane.b32.xlu0 %v926, 111
        %v929 = vpop.permute.xlu0 %928
        %v931 = vsel %vm267, %v924, 0
        %v934 = vand.u32 %v929, %v274
        %936 = vmatpush.bf16.msra.mxu0 0
        %937 = vmatpush.bf16.msra.mxu0 0
        %938 = vmatpush.bf16.msra.mxu0 0
        %939 = vmatpush.bf16.msra.mxu0 0
        %940 = vmatpush.bf16.msra.mxu0 0
        %941 = vmatpush.bf16.msra.mxu0 0
        %942 = vmatpush.bf16.msra.mxu0 0
        %943 = vmatpush.bf16.msra.mxu0 %v934
        %944 = vmatmul.bf16.gmra.mxu0 %v931
        %v945 = vpop.f32.mrf.mxu0
        %v946 = vadd.f32 0.0, %v945
        %v947 = vpop.f32.mrf.mxu0
        %948 = vdwg.mxu0
        %v949 = vadd.f32 %v850, %v946
        %950 = vst [vmem:[#allocation1] ss:$4 sm:$0xff] %v256
        %v951 = vld.sshfl [vmem:[#allocation1] sm:$0xff pattern:$0x73625140]
        %v953 = vld.sshfl [vmem:[#allocation1 + $0x8] sm:$0xff pattern:$0x73625140]
        %v955 = vld.sshfl [vmem:[#allocation1 + $0x10] sm:$0xff pattern:$0x73625140]
        %v957 = vld.sshfl [vmem:[#allocation1 + $0x18] sm:$0xff pattern:$0x73625140]
        %959 = vrot.lane.b32.xlu0 %v951, 95
        %v960 = vpop.permute.xlu0 %959
        %961 = vrot.lane.b32.xlu0 %v953, 95
        %v962 = vpop.permute.xlu0 %961
        %963 = vrot.lane.b32.xlu0 %v955, 95
        %v964 = vpop.permute.xlu0 %963
        %965 = vrot.lane.b32.xlu0 %v957, 95
        %v966 = vpop.permute.xlu0 %965
        %vm967 = vcmask 777216
        %v968 = vsel %vm967, %v960, %v962
        %v969 = vsel %vm967, %v962, %v964
        %v970 = vsel %vm967, %v964, %v966
        %v972 = vand.u32 %v968, %v274
        %v975 = vand.u32 %v969, %v274
        %v978 = vand.u32 %v970, %v274
        %980 = vmatpush.bf16.msra.mxu0 0
        %981 = vmatpush.bf16.msra.mxu0 0
        %982 = vmatpush.bf16.msra.mxu0 0
        %983 = vmatpush.bf16.msra.mxu0 0
        %984 = vmatpush.bf16.msra.mxu0 0
        %985 = vmatpush.bf16.msra.mxu0 0
        %986 = vmatpush.bf16.msra.mxu0 0
        %987 = vmatpush.bf16.msra.mxu0 %v972
        %988 = vmatmul.bf16.gmra.mxu0 %v931
        %v989 = vpop.f32.mrf.mxu0
        %v990 = vadd.f32 0.0, %v989
        %v991 = vpop.f32.mrf.mxu0
        %992 = vdwg.mxu0
        %993 = vmatpush.bf16.msra.mxu0 0
        %994 = vmatpush.bf16.msra.mxu0 0
        %995 = vmatpush.bf16.msra.mxu0 0
        %996 = vmatpush.bf16.msra.mxu0 0
        %997 = vmatpush.bf16.msra.mxu0 0
        %998 = vmatpush.bf16.msra.mxu0 0
        %999 = vmatpush.bf16.msra.mxu0 0
        %1000 = vmatpush.bf16.msra.mxu0 %v975
        %1001 = vmatmul.bf16.gmra.mxu0 %v931
        %v1002 = vpop.f32.mrf.mxu0
        %v1003 = vadd.f32 0.0, %v1002
        %v1004 = vpop.f32.mrf.mxu0
        %1005 = vdwg.mxu0
        %1006 = vmatpush.bf16.msra.mxu0 0
        %1007 = vmatpush.bf16.msra.mxu0 0
        %1008 = vmatpush.bf16.msra.mxu0 0
        %1009 = vmatpush.bf16.msra.mxu0 0
        %1010 = vmatpush.bf16.msra.mxu0 0
        %1011 = vmatpush.bf16.msra.mxu0 0
        %1012 = vmatpush.bf16.msra.mxu0 0
        %1013 = vmatpush.bf16.msra.mxu0 %v978
        %1014 = vmatmul.bf16.gmra.mxu0 %v931
        %v1015 = vpop.f32.mrf.mxu0
        %v1016 = vadd.f32 0.0, %v1015
        %v1017 = vpop.f32.mrf.mxu0
        %1018 = vdwg.mxu0
        %v1019 = vadd.f32 %v920, %v990
        %v1020 = vadd.f32 %v921, %v1003
        %v1021 = vadd.f32 %v922, %v1016
        %s1022 = scalar_lea.vmem %s1, 32
        %v1023 = vld [vmem:[%s1022] sm:$0xf]
        %1024 = vst [vmem:[#allocation1] ss:$4 sm:$0xff] %v255
        %v1025 = vld.sshfl [vmem:[#allocation1] sm:$0xff pattern:$0x73625140]
        %1027 = vrot.lane.b32.xlu0 %v1025, 110
        %v1028 = vpop.permute.xlu0 %1027
        %v1030 = vsel %vm267, %v1023, 0
        %v1033 = vand.u32 %v1028, %v274
        %1035 = vmatpush.bf16.msra.mxu0 0
        %1036 = vmatpush.bf16.msra.mxu0 0
        %1037 = vmatpush.bf16.msra.mxu0 0
        %1038 = vmatpush.bf16.msra.mxu0 0
        %1039 = vmatpush.bf16.msra.mxu0 0
        %1040 = vmatpush.bf16.msra.mxu0 0
        %1041 = vmatpush.bf16.msra.mxu0 0
        %1042 = vmatpush.bf16.msra.mxu0 %v1033
        %1043 = vmatmul.bf16.gmra.mxu0 %v1030
        %v1044 = vpop.f32.mrf.mxu0
        %v1045 = vadd.f32 0.0, %v1044
        %v1046 = vpop.f32.mrf.mxu0
        %1047 = vdwg.mxu0
        %v1048 = vadd.f32 %v949, %v1045
        %1049 = vst [vmem:[#allocation1] ss:$4 sm:$0xff] %v256
        %v1050 = vld.sshfl [vmem:[#allocation1] sm:$0xff pattern:$0x73625140]
        %v1052 = vld.sshfl [vmem:[#allocation1 + $0x8] sm:$0xff pattern:$0x73625140]
        %v1054 = vld.sshfl [vmem:[#allocation1 + $0x10] sm:$0xff pattern:$0x73625140]
        %v1056 = vld.sshfl [vmem:[#allocation1 + $0x18] sm:$0xff pattern:$0x73625140]
        %1058 = vrot.lane.b32.xlu0 %v1050, 94
        %v1059 = vpop.permute.xlu0 %1058
        %1060 = vrot.lane.b32.xlu0 %v1052, 94
        %v1061 = vpop.permute.xlu0 %1060
        %1062 = vrot.lane.b32.xlu0 %v1054, 94
        %v1063 = vpop.permute.xlu0 %1062
        %1064 = vrot.lane.b32.xlu0 %v1056, 94
        %v1065 = vpop.permute.xlu0 %1064
        %vm1066 = vcmask 769024
        %v1067 = vsel %vm1066, %v1059, %v1061
        %v1068 = vsel %vm1066, %v1061, %v1063
        %v1069 = vsel %vm1066, %v1063, %v1065
        %v1071 = vand.u32 %v1067, %v274
        %v1074 = vand.u32 %v1068, %v274
        %v1077 = vand.u32 %v1069, %v274
        %1079 = vmatpush.bf16.msra.mxu0 0
        %1080 = vmatpush.bf16.msra.mxu0 0
        %1081 = vmatpush.bf16.msra.mxu0 0
        %1082 = vmatpush.bf16.msra.mxu0 0
        %1083 = vmatpush.bf16.msra.mxu0 0
        %1084 = vmatpush.bf16.msra.mxu0 0
        %1085 = vmatpush.bf16.msra.mxu0 0
        %1086 = vmatpush.bf16.msra.mxu0 %v1071
        %1087 = vmatmul.bf16.gmra.mxu0 %v1030
        %v1088 = vpop.f32.mrf.mxu0
        %v1089 = vadd.f32 0.0, %v1088
        %v1090 = vpop.f32.mrf.mxu0
        %1091 = vdwg.mxu0
        %1092 = vmatpush.bf16.msra.mxu0 0
        %1093 = vmatpush.bf16.msra.mxu0 0
        %1094 = vmatpush.bf16.msra.mxu0 0
        %1095 = vmatpush.bf16.msra.mxu0 0
        %1096 = vmatpush.bf16.msra.mxu0 0
        %1097 = vmatpush.bf16.msra.mxu0 0
        %1098 = vmatpush.bf16.msra.mxu0 0
        %1099 = vmatpush.bf16.msra.mxu0 %v1074
        %1100 = vmatmul.bf16.gmra.mxu0 %v1030
        %v1101 = vpop.f32.mrf.mxu0
        %v1102 = vadd.f32 0.0, %v1101
        %v1103 = vpop.f32.mrf.mxu0
        %1104 = vdwg.mxu0
        %1105 = vmatpush.bf16.msra.mxu0 0
        %1106 = vmatpush.bf16.msra.mxu0 0
        %1107 = vmatpush.bf16.msra.mxu0 0
        %1108 = vmatpush.bf16.msra.mxu0 0
        %1109 = vmatpush.bf16.msra.mxu0 0
        %1110 = vmatpush.bf16.msra.mxu0 0
        %1111 = vmatpush.bf16.msra.mxu0 0
        %1112 = vmatpush.bf16.msra.mxu0 %v1077
        %1113 = vmatmul.bf16.gmra.mxu0 %v1030
        %v1114 = vpop.f32.mrf.mxu0
        %v1115 = vadd.f32 0.0, %v1114
        %v1116 = vpop.f32.mrf.mxu0
        %1117 = vdwg.mxu0
        %v1118 = vadd.f32 %v1019, %v1089
        %v1119 = vadd.f32 %v1020, %v1102
        %v1120 = vadd.f32 %v1021, %v1115
        %1122 = vset.pattern.permute.xlu0 0
        %1123 = vperm.xlu0 %1122, %v257
        %v1124 = vpop.permute.xlu0 %1123
        %v1126 = vadd.f32 %v1048, %v1124
        %v1127 = vmax.f32 %v1126, 0.0
        %v1128 = vadd.f32 %v1118, %v1124
        %v1129 = vadd.f32 %v1119, %v1124
        %v1130 = vadd.f32 %v1120, %v1124
        %v1131 = vmax.f32 %v1128, 0.0
        %v1132 = vmax.f32 %v1129, 0.0
        %v1133 = vmax.f32 %v1130, 0.0
        %1135 = vset.pattern.permute.xlu0 0
        %1136 = vperm.xlu0 %1135, %v1127
        %v1137 = vpop.permute.xlu0 %1136
        %v1139 = vmul.f32 %v1137, %v1131
        %v1140 = vmul.f32 %v1137, %v1132
        %v1141 = vadd.f32 %v1139, 0.0
        %v1142 = vadd.f32 %v1140, 0.0
        %1143 = vset.pattern.permute.xlu0 1
        %1144 = vperm.xlu0 %1143, %v1127
        %v1145 = vpop.permute.xlu0 %1144
        %v1147 = vmul.f32 %v1145, %v1131
        %v1148 = vmul.f32 %v1145, %v1132
        %v1149 = vmul.f32 %v1145, %v1133
        %1153 = vrot.lane.b32.xlu0 %v1147, 127
        %v1154 = vpop.permute.xlu0 %1153
        %1155 = vrot.lane.b32.xlu0 %v1148, 127
        %v1156 = vpop.permute.xlu0 %1155
        %1157 = vrot.lane.b32.xlu0 %v1149, 127
        %v1158 = vpop.permute.xlu0 %1157
        %vm1159 = vcmask 1039360
        %v1160 = vsel %vm1159, %v1154, %v1156
        %v1161 = vsel %vm1159, %v1156, %v1158
        %v1164 = vadd.f32 %v1141, %v1160
        %v1165 = vadd.f32 %v1142, %v1161
        %1166 = vset.pattern.permute.xlu0 2
        %1167 = vperm.xlu0 %1166, %v1127
        %v1168 = vpop.permute.xlu0 %1167
        %v1170 = vmul.f32 %v1168, %v1131
        %v1171 = vmul.f32 %v1168, %v1132
        %v1172 = vmul.f32 %v1168, %v1133
        %1176 = vrot.lane.b32.xlu0 %v1170, 126
        %v1177 = vpop.permute.xlu0 %1176
        %1178 = vrot.lane.b32.xlu0 %v1171, 126
        %v1179 = vpop.permute.xlu0 %1178
        %1180 = vrot.lane.b32.xlu0 %v1172, 126
        %v1181 = vpop.permute.xlu0 %1180
        %vm1182 = vcmask 1031168
        %v1183 = vsel %vm1182, %v1177, %v1179
        %v1184 = vsel %vm1182, %v1179, %v1181
        %v1187 = vadd.f32 %v1164, %v1183
        %v1188 = vadd.f32 %v1165, %v1184
        %1189 = vset.pattern.permute.xlu0 3
        %1190 = vperm.xlu0 %1189, %v1127
        %v1191 = vpop.permute.xlu0 %1190
        %v1193 = vmul.f32 %v1191, %v1131
        %v1194 = vmul.f32 %v1191, %v1132
        %v1195 = vmul.f32 %v1191, %v1133
        %1199 = vrot.lane.b32.xlu0 %v1193, 125
        %v1200 = vpop.permute.xlu0 %1199
        %1201 = vrot.lane.b32.xlu0 %v1194, 125
        %v1202 = vpop.permute.xlu0 %1201
        %1203 = vrot.lane.b32.xlu0 %v1195, 125
        %v1204 = vpop.permute.xlu0 %1203
        %vm1205 = vcmask 1022976
        %v1206 = vsel %vm1205, %v1200, %v1202
        %v1207 = vsel %vm1205, %v1202, %v1204
        %v1210 = vadd.f32 %v1187, %v1206
        %v1211 = vadd.f32 %v1188, %v1207
        %1212 = vset.pattern.permute.xlu0 4
        %1213 = vperm.xlu0 %1212, %v1127
        %v1214 = vpop.permute.xlu0 %1213
        %v1216 = vmul.f32 %v1214, %v1131
        %v1217 = vmul.f32 %v1214, %v1132
        %v1218 = vmul.f32 %v1214, %v1133
        %1222 = vrot.lane.b32.xlu0 %v1216, 124
        %v1223 = vpop.permute.xlu0 %1222
        %1224 = vrot.lane.b32.xlu0 %v1217, 124
        %v1225 = vpop.permute.xlu0 %1224
        %1226 = vrot.lane.b32.xlu0 %v1218, 124
        %v1227 = vpop.permute.xlu0 %1226
        %vm1228 = vcmask 1014784
        %v1229 = vsel %vm1228, %v1223, %v1225
        %v1230 = vsel %vm1228, %v1225, %v1227
        %v1233 = vadd.f32 %v1210, %v1229
        %v1234 = vadd.f32 %v1211, %v1230
        %1235 = vset.pattern.permute.xlu0 5
        %1236 = vperm.xlu0 %1235, %v1127
        %v1237 = vpop.permute.xlu0 %1236
        %v1239 = vmul.f32 %v1237, %v1131
        %v1240 = vmul.f32 %v1237, %v1132
        %v1241 = vmul.f32 %v1237, %v1133
        %1245 = vrot.lane.b32.xlu0 %v1239, 123
        %v1246 = vpop.permute.xlu0 %1245
        %1247 = vrot.lane.b32.xlu0 %v1240, 123
        %v1248 = vpop.permute.xlu0 %1247
        %1249 = vrot.lane.b32.xlu0 %v1241, 123
        %v1250 = vpop.permute.xlu0 %1249
        %vm1251 = vcmask 1006592
        %v1252 = vsel %vm1251, %v1246, %v1248
        %v1253 = vsel %vm1251, %v1248, %v1250
        %v1256 = vadd.f32 %v1233, %v1252
        %v1257 = vadd.f32 %v1234, %v1253
        %1258 = vset.pattern.permute.xlu0 8
        %1259 = vperm.xlu0 %1258, %v1127
        %v1260 = vpop.permute.xlu0 %1259
        %v1262 = vmul.f32 %v1260, %v1131
        %v1263 = vmul.f32 %v1260, %v1132
        %v1264 = vmul.f32 %v1260, %v1133
        %1268 = vrot.lane.b32.xlu0 %v1262, 112
        %v1269 = vpop.permute.xlu0 %1268
        %1270 = vrot.lane.b32.xlu0 %v1263, 112
        %v1271 = vpop.permute.xlu0 %1270
        %1272 = vrot.lane.b32.xlu0 %v1264, 112
        %v1273 = vpop.permute.xlu0 %1272
        %vm1274 = vcmask 916480
        %v1275 = vsel %vm1274, %v1269, %v1271
        %v1276 = vsel %vm1274, %v1271, %v1273
        %v1279 = vadd.f32 %v1256, %v1275
        %v1280 = vadd.f32 %v1257, %v1276
        %1281 = vset.pattern.permute.xlu0 9
        %1282 = vperm.xlu0 %1281, %v1127
        %v1283 = vpop.permute.xlu0 %1282
        %v1285 = vmul.f32 %v1283, %v1131
        %v1286 = vmul.f32 %v1283, %v1132
        %v1287 = vmul.f32 %v1283, %v1133
        %1291 = vrot.lane.b32.xlu0 %v1285, 111
        %v1292 = vpop.permute.xlu0 %1291
        %1293 = vrot.lane.b32.xlu0 %v1286, 111
        %v1294 = vpop.permute.xlu0 %1293
        %1295 = vrot.lane.b32.xlu0 %v1287, 111
        %v1296 = vpop.permute.xlu0 %1295
        %vm1297 = vcmask 908288
        %v1298 = vsel %vm1297, %v1292, %v1294
        %v1299 = vsel %vm1297, %v1294, %v1296
        %v1302 = vadd.f32 %v1279, %v1298
        %v1303 = vadd.f32 %v1280, %v1299
        %1304 = vset.pattern.permute.xlu0 10
        %1305 = vperm.xlu0 %1304, %v1127
        %v1306 = vpop.permute.xlu0 %1305
        %v1308 = vmul.f32 %v1306, %v1131
        %v1309 = vmul.f32 %v1306, %v1132
        %v1310 = vmul.f32 %v1306, %v1133
        %1314 = vrot.lane.b32.xlu0 %v1308, 110
        %v1315 = vpop.permute.xlu0 %1314
        %1316 = vrot.lane.b32.xlu0 %v1309, 110
        %v1317 = vpop.permute.xlu0 %1316
        %1318 = vrot.lane.b32.xlu0 %v1310, 110
        %v1319 = vpop.permute.xlu0 %1318
        %vm1320 = vcmask 900096
        %v1321 = vsel %vm1320, %v1315, %v1317
        %v1322 = vsel %vm1320, %v1317, %v1319
        %v1325 = vadd.f32 %v1302, %v1321
        %v1326 = vadd.f32 %v1303, %v1322
        %1327 = vset.pattern.permute.xlu0 11
        %1328 = vperm.xlu0 %1327, %v1127
        %v1329 = vpop.permute.xlu0 %1328
        %v1331 = vmul.f32 %v1329, %v1131
        %v1332 = vmul.f32 %v1329, %v1132
        %v1333 = vmul.f32 %v1329, %v1133
        %1337 = vrot.lane.b32.xlu0 %v1331, 109
        %v1338 = vpop.permute.xlu0 %1337
        %1339 = vrot.lane.b32.xlu0 %v1332, 109
        %v1340 = vpop.permute.xlu0 %1339
        %1341 = vrot.lane.b32.xlu0 %v1333, 109
        %v1342 = vpop.permute.xlu0 %1341
        %vm1343 = vcmask 891904
        %v1344 = vsel %vm1343, %v1338, %v1340
        %v1345 = vsel %vm1343, %v1340, %v1342
        %v1348 = vadd.f32 %v1325, %v1344
        %v1349 = vadd.f32 %v1326, %v1345
        %1350 = vset.pattern.permute.xlu0 12
        %1351 = vperm.xlu0 %1350, %v1127
        %v1352 = vpop.permute.xlu0 %1351
        %v1354 = vmul.f32 %v1352, %v1131
        %v1355 = vmul.f32 %v1352, %v1132
        %v1356 = vmul.f32 %v1352, %v1133
        %1360 = vrot.lane.b32.xlu0 %v1354, 108
        %v1361 = vpop.permute.xlu0 %1360
        %1362 = vrot.lane.b32.xlu0 %v1355, 108
        %v1363 = vpop.permute.xlu0 %1362
        %1364 = vrot.lane.b32.xlu0 %v1356, 108
        %v1365 = vpop.permute.xlu0 %1364
        %vm1366 = vcmask 883712
        %v1367 = vsel %vm1366, %v1361, %v1363
        %v1368 = vsel %vm1366, %v1363, %v1365
        %v1371 = vadd.f32 %v1348, %v1367
        %v1372 = vadd.f32 %v1349, %v1368
        %1373 = vset.pattern.permute.xlu0 13
        %1374 = vperm.xlu0 %1373, %v1127
        %v1375 = vpop.permute.xlu0 %1374
        %v1377 = vmul.f32 %v1375, %v1131
        %v1378 = vmul.f32 %v1375, %v1132
        %v1379 = vmul.f32 %v1375, %v1133
        %1383 = vrot.lane.b32.xlu0 %v1377, 107
        %v1384 = vpop.permute.xlu0 %1383
        %1385 = vrot.lane.b32.xlu0 %v1378, 107
        %v1386 = vpop.permute.xlu0 %1385
        %1387 = vrot.lane.b32.xlu0 %v1379, 107
        %v1388 = vpop.permute.xlu0 %1387
        %vm1389 = vcmask 875520
        %v1390 = vsel %vm1389, %v1384, %v1386
        %v1391 = vsel %vm1389, %v1386, %v1388
        %v1394 = vadd.f32 %v1371, %v1390
        %v1395 = vadd.f32 %v1372, %v1391
        %1396 = vset.pattern.permute.xlu0 16
        %1397 = vperm.xlu0 %1396, %v1127
        %v1398 = vpop.permute.xlu0 %1397
        %v1400 = vmul.f32 %v1398, %v1131
        %v1401 = vmul.f32 %v1398, %v1132
        %v1402 = vmul.f32 %v1398, %v1133
        %1406 = vrot.lane.b32.xlu0 %v1400, 96
        %v1407 = vpop.permute.xlu0 %1406
        %1408 = vrot.lane.b32.xlu0 %v1401, 96
        %v1409 = vpop.permute.xlu0 %1408
        %1410 = vrot.lane.b32.xlu0 %v1402, 96
        %v1411 = vpop.permute.xlu0 %1410
        %vm1412 = vcmask 785408
        %v1413 = vsel %vm1412, %v1407, %v1409
        %v1414 = vsel %vm1412, %v1409, %v1411
        %v1417 = vadd.f32 %v1394, %v1413
        %v1418 = vadd.f32 %v1395, %v1414
        %1419 = vset.pattern.permute.xlu0 17
        %1420 = vperm.xlu0 %1419, %v1127
        %v1421 = vpop.permute.xlu0 %1420
        %v1423 = vmul.f32 %v1421, %v1131
        %v1424 = vmul.f32 %v1421, %v1132
        %v1425 = vmul.f32 %v1421, %v1133
        %1429 = vrot.lane.b32.xlu0 %v1423, 95
        %v1430 = vpop.permute.xlu0 %1429
        %1431 = vrot.lane.b32.xlu0 %v1424, 95
        %v1432 = vpop.permute.xlu0 %1431
        %1433 = vrot.lane.b32.xlu0 %v1425, 95
        %v1434 = vpop.permute.xlu0 %1433
        %vm1435 = vcmask 777216
        %v1436 = vsel %vm1435, %v1430, %v1432
        %v1437 = vsel %vm1435, %v1432, %v1434
        %v1440 = vadd.f32 %v1417, %v1436
        %v1441 = vadd.f32 %v1418, %v1437
        %1442 = vset.pattern.permute.xlu0 18
        %1443 = vperm.xlu0 %1442, %v1127
        %v1444 = vpop.permute.xlu0 %1443
        %v1446 = vmul.f32 %v1444, %v1131
        %v1447 = vmul.f32 %v1444, %v1132
        %v1448 = vmul.f32 %v1444, %v1133
        %1452 = vrot.lane.b32.xlu0 %v1446, 94
        %v1453 = vpop.permute.xlu0 %1452
        %1454 = vrot.lane.b32.xlu0 %v1447, 94
        %v1455 = vpop.permute.xlu0 %1454
        %1456 = vrot.lane.b32.xlu0 %v1448, 94
        %v1457 = vpop.permute.xlu0 %1456
        %vm1458 = vcmask 769024
        %v1459 = vsel %vm1458, %v1453, %v1455
        %v1460 = vsel %vm1458, %v1455, %v1457
        %v1463 = vadd.f32 %v1440, %v1459
        %v1464 = vadd.f32 %v1441, %v1460
        %1465 = vset.pattern.permute.xlu0 19
        %1466 = vperm.xlu0 %1465, %v1127
        %v1467 = vpop.permute.xlu0 %1466
        %v1469 = vmul.f32 %v1467, %v1131
        %v1470 = vmul.f32 %v1467, %v1132
        %v1471 = vmul.f32 %v1467, %v1133
        %1475 = vrot.lane.b32.xlu0 %v1469, 93
        %v1476 = vpop.permute.xlu0 %1475
        %1477 = vrot.lane.b32.xlu0 %v1470, 93
        %v1478 = vpop.permute.xlu0 %1477
        %1479 = vrot.lane.b32.xlu0 %v1471, 93
        %v1480 = vpop.permute.xlu0 %1479
        %vm1481 = vcmask 760832
        %v1482 = vsel %vm1481, %v1476, %v1478
        %v1483 = vsel %vm1481, %v1478, %v1480
        %v1486 = vadd.f32 %v1463, %v1482
        %v1487 = vadd.f32 %v1464, %v1483
        %1488 = vset.pattern.permute.xlu0 20
        %1489 = vperm.xlu0 %1488, %v1127
        %v1490 = vpop.permute.xlu0 %1489
        %v1492 = vmul.f32 %v1490, %v1131
        %v1493 = vmul.f32 %v1490, %v1132
        %v1494 = vmul.f32 %v1490, %v1133
        %1498 = vrot.lane.b32.xlu0 %v1492, 92
        %v1499 = vpop.permute.xlu0 %1498
        %1500 = vrot.lane.b32.xlu0 %v1493, 92
        %v1501 = vpop.permute.xlu0 %1500
        %1502 = vrot.lane.b32.xlu0 %v1494, 92
        %v1503 = vpop.permute.xlu0 %1502
        %vm1504 = vcmask 752640
        %v1505 = vsel %vm1504, %v1499, %v1501
        %v1506 = vsel %vm1504, %v1501, %v1503
        %v1509 = vadd.f32 %v1486, %v1505
        %v1510 = vadd.f32 %v1487, %v1506
        %1511 = vset.pattern.permute.xlu0 21
        %1512 = vperm.xlu0 %1511, %v1127
        %v1513 = vpop.permute.xlu0 %1512
        %v1515 = vmul.f32 %v1513, %v1131
        %v1516 = vmul.f32 %v1513, %v1132
        %v1517 = vmul.f32 %v1513, %v1133
        %1521 = vrot.lane.b32.xlu0 %v1515, 91
        %v1522 = vpop.permute.xlu0 %1521
        %1523 = vrot.lane.b32.xlu0 %v1516, 91
        %v1524 = vpop.permute.xlu0 %1523
        %1525 = vrot.lane.b32.xlu0 %v1517, 91
        %v1526 = vpop.permute.xlu0 %1525
        %vm1527 = vcmask 744448
        %v1528 = vsel %vm1527, %v1522, %v1524
        %v1529 = vsel %vm1527, %v1524, %v1526
        %v1532 = vadd.f32 %v1509, %v1528
        %v1533 = vadd.f32 %v1510, %v1529
        %1534 = vset.pattern.permute.xlu0 24
        %1535 = vperm.xlu0 %1534, %v1127
        %v1536 = vpop.permute.xlu0 %1535
        %v1538 = vmul.f32 %v1536, %v1131
        %v1539 = vmul.f32 %v1536, %v1132
        %v1540 = vmul.f32 %v1536, %v1133
        %1544 = vrot.lane.b32.xlu0 %v1538, 80
        %v1545 = vpop.permute.xlu0 %1544
        %1546 = vrot.lane.b32.xlu0 %v1539, 80
        %v1547 = vpop.permute.xlu0 %1546
        %1548 = vrot.lane.b32.xlu0 %v1540, 80
        %v1549 = vpop.permute.xlu0 %1548
        %vm1550 = vcmask 654336
        %v1551 = vsel %vm1550, %v1545, %v1547
        %v1552 = vsel %vm1550, %v1547, %v1549
        %v1555 = vadd.f32 %v1532, %v1551
        %v1556 = vadd.f32 %v1533, %v1552
        %1557 = vset.pattern.permute.xlu0 25
        %1558 = vperm.xlu0 %1557, %v1127
        %v1559 = vpop.permute.xlu0 %1558
        %v1561 = vmul.f32 %v1559, %v1131
        %v1562 = vmul.f32 %v1559, %v1132
        %v1563 = vmul.f32 %v1559, %v1133
        %1567 = vrot.lane.b32.xlu0 %v1561, 79
        %v1568 = vpop.permute.xlu0 %1567
        %1569 = vrot.lane.b32.xlu0 %v1562, 79
        %v1570 = vpop.permute.xlu0 %1569
        %1571 = vrot.lane.b32.xlu0 %v1563, 79
        %v1572 = vpop.permute.xlu0 %1571
        %vm1573 = vcmask 646144
        %v1574 = vsel %vm1573, %v1568, %v1570
        %v1575 = vsel %vm1573, %v1570, %v1572
        %v1578 = vadd.f32 %v1555, %v1574
        %v1579 = vadd.f32 %v1556, %v1575
        %1580 = vset.pattern.permute.xlu0 26
        %1581 = vperm.xlu0 %1580, %v1127
        %v1582 = vpop.permute.xlu0 %1581
        %v1584 = vmul.f32 %v1582, %v1131
        %v1585 = vmul.f32 %v1582, %v1132
        %v1586 = vmul.f32 %v1582, %v1133
        %1590 = vrot.lane.b32.xlu0 %v1584, 78
        %v1591 = vpop.permute.xlu0 %1590
        %1592 = vrot.lane.b32.xlu0 %v1585, 78
        %v1593 = vpop.permute.xlu0 %1592
        %1594 = vrot.lane.b32.xlu0 %v1586, 78
        %v1595 = vpop.permute.xlu0 %1594
        %vm1596 = vcmask 637952
        %v1597 = vsel %vm1596, %v1591, %v1593
        %v1598 = vsel %vm1596, %v1593, %v1595
        %v1601 = vadd.f32 %v1578, %v1597
        %v1602 = vadd.f32 %v1579, %v1598
        %1603 = vset.pattern.permute.xlu0 27
        %1604 = vperm.xlu0 %1603, %v1127
        %v1605 = vpop.permute.xlu0 %1604
        %v1607 = vmul.f32 %v1605, %v1131
        %v1608 = vmul.f32 %v1605, %v1132
        %v1609 = vmul.f32 %v1605, %v1133
        %1613 = vrot.lane.b32.xlu0 %v1607, 77
        %v1614 = vpop.permute.xlu0 %1613
        %1615 = vrot.lane.b32.xlu0 %v1608, 77
        %v1616 = vpop.permute.xlu0 %1615
        %1617 = vrot.lane.b32.xlu0 %v1609, 77
        %v1618 = vpop.permute.xlu0 %1617
        %vm1619 = vcmask 629760
        %v1620 = vsel %vm1619, %v1614, %v1616
        %v1621 = vsel %vm1619, %v1616, %v1618
        %v1624 = vadd.f32 %v1601, %v1620
        %v1625 = vadd.f32 %v1602, %v1621
        %1626 = vset.pattern.permute.xlu0 28
        %1627 = vperm.xlu0 %1626, %v1127
        %v1628 = vpop.permute.xlu0 %1627
        %v1630 = vmul.f32 %v1628, %v1131
        %v1631 = vmul.f32 %v1628, %v1132
        %v1632 = vmul.f32 %v1628, %v1133
        %1636 = vrot.lane.b32.xlu0 %v1630, 76
        %v1637 = vpop.permute.xlu0 %1636
        %1638 = vrot.lane.b32.xlu0 %v1631, 76
        %v1639 = vpop.permute.xlu0 %1638
        %1640 = vrot.lane.b32.xlu0 %v1632, 76
        %v1641 = vpop.permute.xlu0 %1640
        %vm1642 = vcmask 621568
        %v1643 = vsel %vm1642, %v1637, %v1639
        %v1644 = vsel %vm1642, %v1639, %v1641
        %v1647 = vadd.f32 %v1624, %v1643
        %v1648 = vadd.f32 %v1625, %v1644
        %1649 = vset.pattern.permute.xlu0 29
        %1650 = vperm.xlu0 %1649, %v1127
        %v1651 = vpop.permute.xlu0 %1650
        %v1653 = vmul.f32 %v1651, %v1131
        %v1654 = vmul.f32 %v1651, %v1132
        %v1655 = vmul.f32 %v1651, %v1133
        %1659 = vrot.lane.b32.xlu0 %v1653, 75
        %v1660 = vpop.permute.xlu0 %1659
        %1661 = vrot.lane.b32.xlu0 %v1654, 75
        %v1662 = vpop.permute.xlu0 %1661
        %1663 = vrot.lane.b32.xlu0 %v1655, 75
        %v1664 = vpop.permute.xlu0 %1663
        %vm1665 = vcmask 613376
        %v1666 = vsel %vm1665, %v1660, %v1662
        %v1667 = vsel %vm1665, %v1662, %v1664
        %v1670 = vadd.f32 %v1647, %v1666
        %v1671 = vadd.f32 %v1648, %v1667
        %1672 = vset.pattern.permute.xlu0 32
        %1673 = vperm.xlu0 %1672, %v1127
        %v1674 = vpop.permute.xlu0 %1673
        %v1676 = vmul.f32 %v1674, %v1131
        %v1677 = vmul.f32 %v1674, %v1132
        %v1678 = vmul.f32 %v1674, %v1133
        %1682 = vrot.lane.b32.xlu0 %v1676, 64
        %v1683 = vpop.permute.xlu0 %1682
        %1684 = vrot.lane.b32.xlu0 %v1677, 64
        %v1685 = vpop.permute.xlu0 %1684
        %1686 = vrot.lane.b32.xlu0 %v1678, 64
        %v1687 = vpop.permute.xlu0 %1686
        %vm1688 = vcmask 523264
        %v1689 = vsel %vm1688, %v1683, %v1685
        %v1690 = vsel %vm1688, %v1685, %v1687
        %v1693 = vadd.f32 %v1670, %v1689
        %v1694 = vadd.f32 %v1671, %v1690
        %1695 = vset.pattern.permute.xlu0 33
        %1696 = vperm.xlu0 %1695, %v1127
        %v1697 = vpop.permute.xlu0 %1696
        %v1699 = vmul.f32 %v1697, %v1131
        %v1700 = vmul.f32 %v1697, %v1132
        %v1701 = vmul.f32 %v1697, %v1133
        %1705 = vrot.lane.b32.xlu0 %v1699, 63
        %v1706 = vpop.permute.xlu0 %1705
        %1707 = vrot.lane.b32.xlu0 %v1700, 63
        %v1708 = vpop.permute.xlu0 %1707
        %1709 = vrot.lane.b32.xlu0 %v1701, 63
        %v1710 = vpop.permute.xlu0 %1709
        %vm1711 = vcmask 515072
        %v1712 = vsel %vm1711, %v1706, %v1708
        %v1713 = vsel %vm1711, %v1708, %v1710
        %v1716 = vadd.f32 %v1693, %v1712
        %v1717 = vadd.f32 %v1694, %v1713
        %1718 = vset.pattern.permute.xlu0 34
        %1719 = vperm.xlu0 %1718, %v1127
        %v1720 = vpop.permute.xlu0 %1719
        %v1722 = vmul.f32 %v1720, %v1131
        %v1723 = vmul.f32 %v1720, %v1132
        %v1724 = vmul.f32 %v1720, %v1133
        %1728 = vrot.lane.b32.xlu0 %v1722, 62
        %v1729 = vpop.permute.xlu0 %1728
        %1730 = vrot.lane.b32.xlu0 %v1723, 62
        %v1731 = vpop.permute.xlu0 %1730
        %1732 = vrot.lane.b32.xlu0 %v1724, 62
        %v1733 = vpop.permute.xlu0 %1732
        %vm1734 = vcmask 506880
        %v1735 = vsel %vm1734, %v1729, %v1731
        %v1736 = vsel %vm1734, %v1731, %v1733
        %v1739 = vadd.f32 %v1716, %v1735
        %v1740 = vadd.f32 %v1717, %v1736
        %1741 = vset.pattern.permute.xlu0 35
        %1742 = vperm.xlu0 %1741, %v1127
        %v1743 = vpop.permute.xlu0 %1742
        %v1745 = vmul.f32 %v1743, %v1131
        %v1746 = vmul.f32 %v1743, %v1132
        %v1747 = vmul.f32 %v1743, %v1133
        %1751 = vrot.lane.b32.xlu0 %v1745, 61
        %v1752 = vpop.permute.xlu0 %1751
        %1753 = vrot.lane.b32.xlu0 %v1746, 61
        %v1754 = vpop.permute.xlu0 %1753
        %1755 = vrot.lane.b32.xlu0 %v1747, 61
        %v1756 = vpop.permute.xlu0 %1755
        %vm1757 = vcmask 498688
        %v1758 = vsel %vm1757, %v1752, %v1754
        %v1759 = vsel %vm1757, %v1754, %v1756
        %v1762 = vadd.f32 %v1739, %v1758
        %v1763 = vadd.f32 %v1740, %v1759
        %1764 = vset.pattern.permute.xlu0 36
        %1765 = vperm.xlu0 %1764, %v1127
        %v1766 = vpop.permute.xlu0 %1765
        %v1768 = vmul.f32 %v1766, %v1131
        %v1769 = vmul.f32 %v1766, %v1132
        %v1770 = vmul.f32 %v1766, %v1133
        %1774 = vrot.lane.b32.xlu0 %v1768, 60
        %v1775 = vpop.permute.xlu0 %1774
        %1776 = vrot.lane.b32.xlu0 %v1769, 60
        %v1777 = vpop.permute.xlu0 %1776
        %1778 = vrot.lane.b32.xlu0 %v1770, 60
        %v1779 = vpop.permute.xlu0 %1778
        %vm1780 = vcmask 490496
        %v1781 = vsel %vm1780, %v1775, %v1777
        %v1782 = vsel %vm1780, %v1777, %v1779
        %v1785 = vadd.f32 %v1762, %v1781
        %v1786 = vadd.f32 %v1763, %v1782
        %1787 = vset.pattern.permute.xlu0 37
        %1788 = vperm.xlu0 %1787, %v1127
        %v1789 = vpop.permute.xlu0 %1788
        %v1791 = vmul.f32 %v1789, %v1131
        %v1792 = vmul.f32 %v1789, %v1132
        %v1793 = vmul.f32 %v1789, %v1133
        %1797 = vrot.lane.b32.xlu0 %v1791, 59
        %v1798 = vpop.permute.xlu0 %1797
        %1799 = vrot.lane.b32.xlu0 %v1792, 59
        %v1800 = vpop.permute.xlu0 %1799
        %1801 = vrot.lane.b32.xlu0 %v1793, 59
        %v1802 = vpop.permute.xlu0 %1801
        %vm1803 = vcmask 482304
        %v1804 = vsel %vm1803, %v1798, %v1800
        %v1805 = vsel %vm1803, %v1800, %v1802
        %v1808 = vadd.f32 %v1785, %v1804
        %v1809 = vadd.f32 %v1786, %v1805
        %1810 = vset.pattern.permute.xlu0 40
        %1811 = vperm.xlu0 %1810, %v1127
        %v1812 = vpop.permute.xlu0 %1811
        %v1814 = vmul.f32 %v1812, %v1131
        %v1815 = vmul.f32 %v1812, %v1132
        %v1816 = vmul.f32 %v1812, %v1133
        %1820 = vrot.lane.b32.xlu0 %v1814, 48
        %v1821 = vpop.permute.xlu0 %1820
        %1822 = vrot.lane.b32.xlu0 %v1815, 48
        %v1823 = vpop.permute.xlu0 %1822
        %1824 = vrot.lane.b32.xlu0 %v1816, 48
        %v1825 = vpop.permute.xlu0 %1824
        %vm1826 = vcmask 392192
        %v1827 = vsel %vm1826, %v1821, %v1823
        %v1828 = vsel %vm1826, %v1823, %v1825
        %v1831 = vadd.f32 %v1808, %v1827
        %v1832 = vadd.f32 %v1809, %v1828
        %1833 = vset.pattern.permute.xlu0 41
        %1834 = vperm.xlu0 %1833, %v1127
        %v1835 = vpop.permute.xlu0 %1834
        %v1837 = vmul.f32 %v1835, %v1131
        %v1838 = vmul.f32 %v1835, %v1132
        %v1839 = vmul.f32 %v1835, %v1133
        %1843 = vrot.lane.b32.xlu0 %v1837, 47
        %v1844 = vpop.permute.xlu0 %1843
        %1845 = vrot.lane.b32.xlu0 %v1838, 47
        %v1846 = vpop.permute.xlu0 %1845
        %1847 = vrot.lane.b32.xlu0 %v1839, 47
        %v1848 = vpop.permute.xlu0 %1847
        %vm1849 = vcmask 384000
        %v1850 = vsel %vm1849, %v1844, %v1846
        %v1851 = vsel %vm1849, %v1846, %v1848
        %v1854 = vadd.f32 %v1831, %v1850
        %v1855 = vadd.f32 %v1832, %v1851
        %1856 = vset.pattern.permute.xlu0 42
        %1857 = vperm.xlu0 %1856, %v1127
        %v1858 = vpop.permute.xlu0 %1857
        %v1860 = vmul.f32 %v1858, %v1131
        %v1861 = vmul.f32 %v1858, %v1132
        %v1862 = vmul.f32 %v1858, %v1133
        %1866 = vrot.lane.b32.xlu0 %v1860, 46
        %v1867 = vpop.permute.xlu0 %1866
        %1868 = vrot.lane.b32.xlu0 %v1861, 46
        %v1869 = vpop.permute.xlu0 %1868
        %1870 = vrot.lane.b32.xlu0 %v1862, 46
        %v1871 = vpop.permute.xlu0 %1870
        %vm1872 = vcmask 375808
        %v1873 = vsel %vm1872, %v1867, %v1869
        %v1874 = vsel %vm1872, %v1869, %v1871
        %v1877 = vadd.f32 %v1854, %v1873
        %v1878 = vadd.f32 %v1855, %v1874
        %1879 = vset.pattern.permute.xlu0 43
        %1880 = vperm.xlu0 %1879, %v1127
        %v1881 = vpop.permute.xlu0 %1880
        %v1883 = vmul.f32 %v1881, %v1131
        %v1884 = vmul.f32 %v1881, %v1132
        %v1885 = vmul.f32 %v1881, %v1133
        %1889 = vrot.lane.b32.xlu0 %v1883, 45
        %v1890 = vpop.permute.xlu0 %1889
        %1891 = vrot.lane.b32.xlu0 %v1884, 45
        %v1892 = vpop.permute.xlu0 %1891
        %1893 = vrot.lane.b32.xlu0 %v1885, 45
        %v1894 = vpop.permute.xlu0 %1893
        %vm1895 = vcmask 367616
        %v1896 = vsel %vm1895, %v1890, %v1892
        %v1897 = vsel %vm1895, %v1892, %v1894
        %v1900 = vadd.f32 %v1877, %v1896
        %v1901 = vadd.f32 %v1878, %v1897
        %1902 = vset.pattern.permute.xlu0 44
        %1903 = vperm.xlu0 %1902, %v1127
        %v1904 = vpop.permute.xlu0 %1903
        %v1906 = vmul.f32 %v1904, %v1131
        %v1907 = vmul.f32 %v1904, %v1132
        %v1908 = vmul.f32 %v1904, %v1133
        %1912 = vrot.lane.b32.xlu0 %v1906, 44
        %v1913 = vpop.permute.xlu0 %1912
        %1914 = vrot.lane.b32.xlu0 %v1907, 44
        %v1915 = vpop.permute.xlu0 %1914
        %1916 = vrot.lane.b32.xlu0 %v1908, 44
        %v1917 = vpop.permute.xlu0 %1916
        %vm1918 = vcmask 359424
        %v1919 = vsel %vm1918, %v1913, %v1915
        %v1920 = vsel %vm1918, %v1915, %v1917
        %v1923 = vadd.f32 %v1900, %v1919
        %v1924 = vadd.f32 %v1901, %v1920
        %1925 = vset.pattern.permute.xlu0 45
        %1926 = vperm.xlu0 %1925, %v1127
        %v1927 = vpop.permute.xlu0 %1926
        %v1929 = vmul.f32 %v1927, %v1131
        %v1930 = vmul.f32 %v1927, %v1132
        %v1931 = vmul.f32 %v1927, %v1133
        %1935 = vrot.lane.b32.xlu0 %v1929, 43
        %v1936 = vpop.permute.xlu0 %1935
        %1937 = vrot.lane.b32.xlu0 %v1930, 43
        %v1938 = vpop.permute.xlu0 %1937
        %1939 = vrot.lane.b32.xlu0 %v1931, 43
        %v1940 = vpop.permute.xlu0 %1939
        %vm1941 = vcmask 351232
        %v1942 = vsel %vm1941, %v1936, %v1938
        %v1943 = vsel %vm1941, %v1938, %v1940
        %v1946 = vadd.f32 %v1923, %v1942
        %v1947 = vadd.f32 %v1924, %v1943
        %v1948 = vrot.slane %v1946, 4
        %v1949 = vadd.f32 %v1946, %v1948
        %v1950 = vrot.slane %v1949, 2
        %v1951 = vadd.f32 %v1949, %v1950
        %v1952 = vrot.slane %v1951, 1
        %v1953 = vadd.f32 %v1951, %v1952
        %v1954 = vrot.slane %v1947, 4
        %v1955 = vadd.f32 %v1947, %v1954
        %v1956 = vrot.slane %v1955, 2
        %v1957 = vadd.f32 %v1955, %v1956
        %v1958 = vrot.slane %v1957, 1
        %v1959 = vadd.f32 %v1957, %v1958
        %s1960 = sld [smem:[#allocation2]]
        %v1961 = vstv %s1960
        %v1962 = vmul.f32 %v1953, %v1961
        %v1963 = vmul.f32 %v1959, %v1961
        %s1964 = sld [smem:[#allocation2 + $0x1]]
        %v1965 = vstv %s1964
        %v1966 = vadd.f32 %v1962, %v1965
        %v1967 = vadd.f32 %v1963, %v1965
        %v1970 = vrot.slane %v1967, 7
        %v1971 = vsel %vm271, %v1966, %v1970
        %v1973 = vlaneseq
        %vm1974 = vcmp.ge.s32.totalorder %v1973, 0
        %vm1975 = vcmp.lt.s32.totalorder %v1973, 256
        %vm1976 = vmand %vm1974, %vm1975
        %1977 = vst.msk [vmem:[%s253] sm:$0x3] %vm1976, %v1971
        %p1978 = scmp.lt.s32.totalorder %s17, 1
        %s1979 = scalar_select %p1978, %s17, 1
        %s1980 = smul.addr %s1979, 2
        %s1981 = scalar_lea.vmem %s5, %s1980
        // Predicated region
        $region45: #{siamese_forward.1} parent=39 // pred_check
          %p1982 = pneg %p150
        $region46: #{siamese_forward.1} parent=39 // pred_check_branch
          %1984 = sbr.rel (%p1982) target = $region48
        $region47: #{siamese_forward.1} parent=39 // pred_region
          _
        $region48: #{siamese_forward.1} parent=39 // pred_fallthru
          _
      $region40: #{siamese_forward.1} parent=5 // pred_fallthru
        _
      %p1985 = scmp.le.s32.totalorder 2, %s12
      // Predicated region
      $region49: #{siamese_forward.1} parent=5 // pred_check
        %p1986 = pneg %p1985
      $region50: #{siamese_forward.1} parent=5 // pred_check_branch
        %1988 = sbr.rel (%p1986) target = $region52
      $region51: #{siamese_forward.1} parent=5 // pred_region
        %s1989 = ssub.s32 %s12, 2
        // Predicated region
        $region53: #{siamese_forward.1} parent=51 // pred_check
          %p1990 = pneg %p156
        $region54: #{siamese_forward.1} parent=51 // pred_check_branch
          %1992 = sbr.rel (%p1990) target = $region56
        $region55: #{siamese_forward.1} parent=51 // pred_region
          %p1993 = scmp.lt.s32.totalorder %s18, 1
          %s1994 = scalar_select %p1993, %s18, 1
          %s1995 = smul.addr %s1994, 2
          %s1996 = scalar_lea.vmem %s5, %s1995
        $region56: #{siamese_forward.1} parent=51 // pred_fallthru
          _
      $region52: #{siamese_forward.1} parent=5 // pred_fallthru
        _
    $region6: #{siamese_forward.1} parent=1 // loop_footer
      %s16 = sadd.s32 1, %s12
    $region7: #{siamese_forward.1} parent=1 // loop_footer_branch
      %11 = sbr.rel target = $region3
    $region8: #{siamese_forward.1} parent=1 // loop_exit
      _
    %1997 = vsyncpa [#allocation3], 1
    %s1998 = scalar_lea.sflag [#allocation3], 1
    %1999 = vsyncpa %s1998, 1

</llo_original>
